<compile_context>
chip_gen: v7x
topology: tpu7x:2x2x1
jax: 0.10.0
libtpu: 0.0.40
codegen_flags: <defaults>
</compile_context>

<pallas_src>
import jax
import jax.numpy as jnp
from jax.experimental import pallas as pl
from jax.experimental.pallas import tpu as pltpu

EPS = 1e-5          # BatchNorm2d default eps
NEG_SLOPE = 0.01    # LeakyReLU default negative_slope
LANE = 128
SUBLANE = 8


def _round_up(x, m):
    return (x + m - 1) // m * m


def stats_kernel(a_ref, w_ref, s_ref, ss_ref):
    """Pass 1: conv-as-matmul on an M-tile -> per-tile channel sum / sumsq partials.

    a_ref:  (tile_m, Kp)  im2col patch tile (zero-padded rows/cols contribute 0)
    w_ref:  (Kp, Cp)      flattened conv weight (zero-padded)
    s_ref:  (1, Cp)       this tile's per-channel sum partial
    ss_ref: (1, Cp)       this tile's per-channel sum-of-squares partial
    """
    y = jnp.dot(a_ref[...], w_ref[...], preferred_element_type=jnp.float32)
    s_ref[...] = jnp.sum(y, axis=0, keepdims=True)
    ss_ref[...] = jnp.sum(y * y, axis=0, keepdims=True)


def conv_bn_lrelu_kernel(a_ref, w_ref, scale_ref, shift_ref, o_ref):
    """Pass 2: recompute conv matmul, fused BN affine + LeakyReLU epilogue (no y I/O)."""
    y = jnp.dot(a_ref[...], w_ref[...], preferred_element_type=jnp.float32)
    z = y * scale_ref[...] + shift_ref[...]
    o_ref[...] = jnp.where(z >= 0, z, NEG_SLOPE * z).astype(o_ref.dtype)


def complicated_conv_layer(x, weight, gamma, beta, pad, tile_m=512):
    """x: (N, Cin, H, W) NCHW; weight: (Cout, Cin, kh, kw). Returns NCHW float32."""
    N, Cin, H, W = x.shape
    Cout, _, kh, kw = weight.shape
    Ho = H + 2 * pad - kh + 1
    Wo = W + 2 * pad - kw + 1
    M = N * Ho * Wo
    K = Cin * kh * kw

    Kp = _round_up(K, SUBLANE)                         # contraction dim: sublane-aligned only
    Cp = _round_up(Cout, LANE)                         # lane-dense output channel dim
    tile_m = _round_up(min(tile_m, _round_up(M, SUBLANE)), SUBLANE)
    Mp = _round_up(M, tile_m)
    grid_m = Mp // tile_m

    # --- glue: patch extraction fused by XLA. Feature dim is channel-major (Cin, kh, kw),
    #     matching the OIHW weight flatten; NHWC output avoids an explicit transpose.
    patches = jax.lax.conv_general_dilated_patches(
        x, (kh, kw), (1, 1), [(pad, pad), (pad, pad)],
        dimension_numbers=("NCHW", "OIHW", "NHWC"))    # (N, Ho, Wo, K)
    a = jnp.pad(patches.reshape(M, K).astype(jnp.float32),
                ((0, Mp - M), (0, Kp - K)))            # (Mp, Kp)
    wt = jnp.pad(weight.reshape(Cout, K).T.astype(jnp.float32),
                 ((0, Kp - K), (0, Cp - Cout)))        # (Kp, Cp)

    # --- pass 1: per-tile conv matmul -> per-tile per-channel sum / sumsq partials ---
    s_part, ss_part = pl.pallas_call(
        stats_kernel,
        out_shape=(jax.ShapeDtypeStruct((grid_m, 1, Cp), jnp.float32),
                   jax.ShapeDtypeStruct((grid_m, 1, Cp), jnp.float32)),
        grid=(grid_m,),
        in_specs=[pl.BlockSpec((tile_m, Kp), lambda i: (i, 0)),
                  pl.BlockSpec((Kp, Cp), lambda i: (0, 0))],
        out_specs=(pl.BlockSpec((None, 1, Cp), lambda i: (i, 0, 0)),
                   pl.BlockSpec((None, 1, Cp), lambda i: (i, 0, 0))),
        compiler_params=pltpu.CompilerParams(
            dimension_semantics=("parallel",)),
    )(a, wt)

    # --- glue: finalize BN affine once (true-M divisor; padded rows/cols contribute 0) ---
    inv_m = 1.0 / float(M)
    s = jnp.sum(s_part, axis=(0, 1))                   # (Cp,)
    ss = jnp.sum(ss_part, axis=(0, 1))                 # (Cp,)
    mean = s * inv_m
    var = jnp.maximum(ss * inv_m - mean * mean, 0.0)   # biased variance, f32
    gpad = jnp.pad(gamma.astype(jnp.float32), (0, Cp - Cout))
    bpad = jnp.pad(beta.astype(jnp.float32), (0, Cp - Cout))
    scale = gpad * jax.lax.rsqrt(var + EPS)            # (Cp,)
    shift = bpad - mean * scale                        # (Cp,)

    # --- pass 2: recompute conv + fused normalize + LeakyReLU, M tiles fully parallel ---
    out_flat = pl.pallas_call(
        conv_bn_lrelu_kernel,
        out_shape=jax.ShapeDtypeStruct((Mp, Cp), jnp.float32),
        grid=(grid_m,),
        in_specs=[pl.BlockSpec((tile_m, Kp), lambda i: (i, 0)),
                  pl.BlockSpec((Kp, Cp), lambda i: (0, 0)),
                  pl.BlockSpec((1, Cp), lambda i: (0, 0)),
                  pl.BlockSpec((1, Cp), lambda i: (0, 0))],
        out_specs=pl.BlockSpec((tile_m, Cp), lambda i: (i, 0)),
        compiler_params=pltpu.CompilerParams(
            dimension_semantics=("parallel",)),
    )(a, wt, scale.reshape(1, Cp), shift.reshape(1, Cp))

    # (Mp, Cp) -> slice off padding -> (N, Ho, Wo, Cout) -> NCHW (module contract)
    out = out_flat[:M, :Cout].reshape(N, Ho, Wo, Cout)
    return jnp.transpose(out, (0, 3, 1, 2))


def reference(x, weight, gamma, beta, pad):
    """Pure-JAX reference matching PyTorch semantics (BN training mode)."""
    y = jax.lax.conv_general_dilated(
        x, weight, window_strides=(1, 1),
        padding=[(pad, pad), (pad, pad)],
        dimension_numbers=("NCHW", "OIHW", "NCHW"),
    )
    mean = jnp.mean(y, axis=(0, 2, 3), keepdims=True)
    var = jnp.mean((y - mean) ** 2, axis=(0, 2, 3), keepdims=True)
    z = (y - mean) * jax.lax.rsqrt(var + EPS)
    z = z * gamma.reshape(1, -1, 1, 1) + beta.reshape(1, -1, 1, 1)
    return jnp.where(z >= 0, z, NEG_SLOPE * z)


if __name__ == "__main__":
    # Small shapes consistent with the module: N=2, Cin=4, H=W=16, Cout=8, k=3, pad=1
    N, Cin, H, W = 2, 4, 16, 16
    Cout, k, pad = 8, 3, 1

    key = jax.random.PRNGKey(0)
    kx, kw = jax.random.split(key)
    x = jax.random.normal(kx, (N, Cin, H, W), dtype=jnp.float32)
    weight = 0.1 * jax.random.normal(kw, (Cout, Cin, k, k), dtype=jnp.float32)
    gamma = jnp.ones((Cout,), dtype=jnp.float32)   # BatchNorm2d default init
    beta = jnp.zeros((Cout,), dtype=jnp.float32)

    fn = jax.jit(complicated_conv_layer, static_argnames=("pad", "tile_m"))
    out = fn(x, weight, gamma, beta, pad=pad)
    out = jax.block_until_ready(out)

    ref = reference(x, weight, gamma, beta, pad)
    assert out.shape == (N, Cout, H, W)
    assert jnp.allclose(out, ref, atol=1e-4, rtol=1e-4), "mismatch vs reference"

    print("KERNEL_OK")
</pallas_src>

<mosaic_0001>
module attributes {stable_mosaic.version = 11 : i64} {
  func.func @stats_kernel(%arg0: i32, %arg1: memref<512x40xf32, #tpu.memory_space<vmem>>, %arg2: memref<40x128xf32, #tpu.memory_space<vmem>>, %arg3: memref<1x1x128xf32, #tpu.memory_space<vmem>>, %arg4: memref<1x1x128xf32, #tpu.memory_space<vmem>>) attributes {dimension_semantics = [#tpu.dimension_semantics<parallel>], iteration_bounds = array<i64: 1>, scalar_prefetch = 0 : i64, scratch_operands = 0 : i64, tpu.core_type = #tpu.core_type<tc>, window_params = [{transform_indices = @transform_0, window_bounds = array<i64: 512, 40>}, {pipeline_mode = #tpu.pipeline_mode<synchronous>, transform_indices = @transform_1, window_bounds = array<i64: 40, 128>}, {transform_indices = @transform_2, window_bounds = array<i64: 1, 1, 128>}, {transform_indices = @transform_3, window_bounds = array<i64: 1, 1, 128>}]} {
    %c0 = arith.constant 0 : index
    %c0_0 = arith.constant 0 : index
    %0 = vector.load %arg1[%c0, %c0_0] : memref<512x40xf32, #tpu.memory_space<vmem>>, vector<512x40xf32>
    %c0_1 = arith.constant 0 : index
    %c0_2 = arith.constant 0 : index
    %1 = vector.load %arg2[%c0_1, %c0_2] : memref<40x128xf32, #tpu.memory_space<vmem>>, vector<40x128xf32>
    %cst = arith.constant dense<0.000000e+00> : vector<512x128xf32>
    %2 = tpu.matmul %0, %1, %cst {dimension_numbers = #tpu.dot_dimension_numbers<[1], [0], [0], [1], [0, 0, 1, 1], [], []>} : vector<512x40xf32>, vector<40x128xf32>, vector<512x128xf32> -> vector<512x128xf32>
    %cst_3 = arith.constant dense<0.000000e+00> : vector<128xf32>
    %3 = vector.multi_reduction <add>, %2, %cst_3 [0] : vector<512x128xf32> to vector<128xf32>
    %4 = vector.shape_cast %3 : vector<128xf32> to vector<1x128xf32>
    %c0_4 = arith.constant 0 : index
    %c0_5 = arith.constant 0 : index
    %c0_6 = arith.constant 0 : index
    %5 = vector.load %arg3[%c0_4, %c0_5, %c0_6] : memref<1x1x128xf32, #tpu.memory_space<vmem>>, vector<1x1x128xf32>
    %6 = vector.shape_cast %5 : vector<1x1x128xf32> to vector<1x128xf32>
    %7 = vector.shape_cast %4 : vector<1x128xf32> to vector<1x1x128xf32>
    tpu.vector_store %arg3[%c0_4, %c0_5, %c0_6], %7 {strides = array<i32>} : memref<1x1x128xf32, #tpu.memory_space<vmem>>, vector<1x1x128xf32>,
    %8 = arith.mulf %2, %2 : vector<512x128xf32>
    %cst_7 = arith.constant dense<0.000000e+00> : vector<128xf32>
    %9 = vector.multi_reduction <add>, %8, %cst_7 [0] : vector<512x128xf32> to vector<128xf32>
    %10 = vector.shape_cast %9 : vector<128xf32> to vector<1x128xf32>
    %c0_8 = arith.constant 0 : index
    %c0_9 = arith.constant 0 : index
    %c0_10 = arith.constant 0 : index
    %11 = vector.load %arg4[%c0_8, %c0_9, %c0_10] : memref<1x1x128xf32, #tpu.memory_space<vmem>>, vector<1x1x128xf32>
    %12 = vector.shape_cast %11 : vector<1x1x128xf32> to vector<1x128xf32>
    %13 = vector.shape_cast %10 : vector<1x128xf32> to vector<1x1x128xf32>
    tpu.vector_store %arg4[%c0_8, %c0_9, %c0_10], %13 {strides = array<i32>} : memref<1x1x128xf32, #tpu.memory_space<vmem>>, vector<1x1x128xf32>,
    return
  }
  func.func @transform_0(%arg0: i32) -> (i32, i32) {
    %c0_i32 = arith.constant 0 : i32
    %c0_i32_0 = arith.constant 0 : i32
    return %arg0, %c0_i32 : i32, i32
  }
  func.func @transform_1(%arg0: i32) -> (i32, i32) {
    %c0_i32 = arith.constant 0 : i32
    %c0_i32_0 = arith.constant 0 : i32
    %c0_i32_1 = arith.constant 0 : i32
    return %c0_i32, %c0_i32_0 : i32, i32
  }
  func.func @transform_2(%arg0: i32) -> (i32, i32, i32) {
    %c0_i32 = arith.constant 0 : i32
    %c0_i32_0 = arith.constant 0 : i32
    %c0_i32_1 = arith.constant 0 : i32
    return %arg0, %c0_i32, %c0_i32_0 : i32, i32, i32
  }
  func.func @transform_3(%arg0: i32) -> (i32, i32, i32) {
    %c0_i32 = arith.constant 0 : i32
    %c0_i32_0 = arith.constant 0 : i32
    %c0_i32_1 = arith.constant 0 : i32
    return %arg0, %c0_i32, %c0_i32_0 : i32, i32, i32
  }
}

module attributes {stable_mosaic.version = 11 : i64} {
  func.func @conv_bn_lrelu_kernel(%arg0: i32, %arg1: memref<512x40xf32, #tpu.memory_space<vmem>>, %arg2: memref<40x128xf32, #tpu.memory_space<vmem>>, %arg3: memref<1x128xf32, #tpu.memory_space<vmem>>, %arg4: memref<1x128xf32, #tpu.memory_space<vmem>>, %arg5: memref<512x128xf32, #tpu.memory_space<vmem>>) attributes {dimension_semantics = [#tpu.dimension_semantics<parallel>], iteration_bounds = array<i64: 1>, scalar_prefetch = 0 : i64, scratch_operands = 0 : i64, tpu.core_type = #tpu.core_type<tc>, window_params = [{transform_indices = @transform_0, window_bounds = array<i64: 512, 40>}, {pipeline_mode = #tpu.pipeline_mode<synchronous>, transform_indices = @transform_1, window_bounds = array<i64: 40, 128>}, {pipeline_mode = #tpu.pipeline_mode<synchronous>, transform_indices = @transform_2, window_bounds = array<i64: 1, 128>}, {pipeline_mode = #tpu.pipeline_mode<synchronous>, transform_indices = @transform_3, window_bounds = array<i64: 1, 128>}, {transform_indices = @transform_4, window_bounds = array<i64: 512, 128>}]} {
    %c0 = arith.constant 0 : index
    %c0_0 = arith.constant 0 : index
    %0 = vector.load %arg1[%c0, %c0_0] : memref<512x40xf32, #tpu.memory_space<vmem>>, vector<512x40xf32>
    %c0_1 = arith.constant 0 : index
    %c0_2 = arith.constant 0 : index
    %1 = vector.load %arg2[%c0_1, %c0_2] : memref<40x128xf32, #tpu.memory_space<vmem>>, vector<40x128xf32>
    %cst = arith.constant dense<0.000000e+00> : vector<512x128xf32>
    %2 = tpu.matmul %0, %1, %cst {dimension_numbers = #tpu.dot_dimension_numbers<[1], [0], [0], [1], [0, 0, 1, 1], [], []>} : vector<512x40xf32>, vector<40x128xf32>, vector<512x128xf32> -> vector<512x128xf32>
    %c0_3 = arith.constant 0 : index
    %c0_4 = arith.constant 0 : index
    %3 = vector.load %arg3[%c0_3, %c0_4] : memref<1x128xf32, #tpu.memory_space<vmem>>, vector<1x128xf32>
    %4 = vector.broadcast %3 : vector<1x128xf32> to vector<512x128xf32>
    %5 = arith.mulf %2, %4 : vector<512x128xf32>
    %c0_5 = arith.constant 0 : index
    %c0_6 = arith.constant 0 : index
    %6 = vector.load %arg4[%c0_5, %c0_6] : memref<1x128xf32, #tpu.memory_space<vmem>>, vector<1x128xf32>
    %7 = vector.broadcast %6 : vector<1x128xf32> to vector<512x128xf32>
    %8 = arith.addf %5, %7 : vector<512x128xf32>
    %cst_7 = arith.constant 0.000000e+00 : f32
    %9 = vector.broadcast %cst_7 : f32 to vector<512x128xf32>
    %10 = arith.cmpf oge, %8, %9 : vector<512x128xf32>
    %cst_8 = arith.constant 0.00999999977 : f32
    %11 = vector.broadcast %cst_8 : f32 to vector<512x128xf32>
    %12 = arith.mulf %11, %8 : vector<512x128xf32>
    %13 = arith.select %10, %8, %12 : vector<512x128xi1>, vector<512x128xf32>
    %c0_9 = arith.constant 0 : index
    %c0_10 = arith.constant 0 : index
    %14 = vector.load %arg5[%c0_9, %c0_10] : memref<512x128xf32, #tpu.memory_space<vmem>>, vector<512x128xf32>
    tpu.vector_store %arg5[%c0_9, %c0_10], %13 {strides = array<i32>} : memref<512x128xf32, #tpu.memory_space<vmem>>, vector<512x128xf32>,
    return
  }
  func.func @transform_0(%arg0: i32) -> (i32, i32) {
    %c0_i32 = arith.constant 0 : i32
    %c0_i32_0 = arith.constant 0 : i32
    return %arg0, %c0_i32 : i32, i32
  }
  func.func @transform_1(%arg0: i32) -> (i32, i32) {
    %c0_i32 = arith.constant 0 : i32
    %c0_i32_0 = arith.constant 0 : i32
    %c0_i32_1 = arith.constant 0 : i32
    return %c0_i32, %c0_i32_0 : i32, i32
  }
  func.func @transform_2(%arg0: i32) -> (i32, i32) {
    %c0_i32 = arith.constant 0 : i32
    %c0_i32_0 = arith.constant 0 : i32
    %c0_i32_1 = arith.constant 0 : i32
    return %c0_i32, %c0_i32_0 : i32, i32
  }
  func.func @transform_3(%arg0: i32) -> (i32, i32) {
    %c0_i32 = arith.constant 0 : i32
    %c0_i32_0 = arith.constant 0 : i32
    %c0_i32_1 = arith.constant 0 : i32
    return %c0_i32, %c0_i32_0 : i32, i32
  }
  func.func @transform_4(%arg0: i32) -> (i32, i32) {
    %c0_i32 = arith.constant 0 : i32
    %c0_i32_0 = arith.constant 0 : i32
    return %arg0, %c0_i32 : i32, i32
  }
}

</mosaic_0001>

<llo_original>
// kernel: complicated_conv_layer.2
$region0: #{complicated_conv_layer.2}
  #allocation0 [shape = 'u32[]', space=smem, size = 0x4, offset = 0x4, fixed_abs, tag = 'smem constant byte address 0x4 - core index']
  #allocation1 [shape = 'u32[144,128]{1,0:T(1,128)}', space=vmem, size = 0x12000, scoped, tag = 'internal scratch']
  %s0 = inlined_call_operand.vmem [shape: f32[512,40], index: 0, kind: input, shape index: {}]
  %s1 = inlined_call_operand.vmem [shape: f32[40,128], index: 1, kind: input, shape index: {}]
  %s2 = inlined_call_operand.vmem [shape: f32[1,1,128], index: 2, kind: output, shape index: {0}]
  %s3 = inlined_call_operand.vmem [shape: f32[1,1,128], index: 3, kind: output, shape index: {1}]
  %4 = xla_tuple %s2, %s3
  %s5 = sld [smem:[#allocation0]]
  $region26: #{complicated_conv_layer.2} parent=0
    _
  %s7 = ssub.s32 1, %s5
  %s8 = scalar_select 0, %s7, %s5
  // Predicated region
  $region2: #{complicated_conv_layer.2} parent=0 // pred_check
    _
  $region3: #{complicated_conv_layer.2} parent=0 // pred_check_branch
    %10 = sbr.rel (0) target = $region5
  $region4: #{complicated_conv_layer.2} parent=0 // pred_region
    _
  $region5: #{complicated_conv_layer.2} parent=0 // pred_fallthru
    _
  // Predicated region
  $region6: #{complicated_conv_layer.2} parent=0 // pred_check
    _
  $region7: #{complicated_conv_layer.2} parent=0 // pred_check_branch
    %12 = sbr.rel (0) target = $region9
  $region8: #{complicated_conv_layer.2} parent=0 // pred_region
    _
  $region9: #{complicated_conv_layer.2} parent=0 // pred_fallthru
    _
  %v13 = vld [vmem:[%s0] sm:$0xff]
  %v14 = vld [vmem:[%s0 + $0x8] sm:$0xff]
  %v15 = vld [vmem:[%s0 + $0x10] sm:$0xff]
  %v16 = vld [vmem:[%s0 + $0x18] sm:$0xff]
  %v17 = vld [vmem:[%s0 + $0x20] sm:$0xff]
  %v18 = vld [vmem:[%s0 + $0x28] sm:$0xff]
  %v19 = vld [vmem:[%s0 + $0x30] sm:$0xff]
  %v20 = vld [vmem:[%s0 + $0x38] sm:$0xff]
  %v21 = vld [vmem:[%s0 + $0x40] sm:$0xff]
  %v22 = vld [vmem:[%s0 + $0x48] sm:$0xff]
  %v23 = vld [vmem:[%s0 + $0x50] sm:$0xff]
  %v24 = vld [vmem:[%s0 + $0x58] sm:$0xff]
  %v25 = vld [vmem:[%s0 + $0x60] sm:$0xff]
  %v26 = vld [vmem:[%s0 + $0x68] sm:$0xff]
  %v27 = vld [vmem:[%s0 + $0x70] sm:$0xff]
  %v28 = vld [vmem:[%s0 + $0x78] sm:$0xff]
  %v29 = vld [vmem:[%s0 + $0x80] sm:$0xff]
  %v30 = vld [vmem:[%s0 + $0x88] sm:$0xff]
  %v31 = vld [vmem:[%s0 + $0x90] sm:$0xff]
  %v32 = vld [vmem:[%s0 + $0x98] sm:$0xff]
  %v33 = vld [vmem:[%s0 + $0xa0] sm:$0xff]
  %v34 = vld [vmem:[%s0 + $0xa8] sm:$0xff]
  %v35 = vld [vmem:[%s0 + $0xb0] sm:$0xff]
  %v36 = vld [vmem:[%s0 + $0xb8] sm:$0xff]
  %v37 = vld [vmem:[%s0 + $0xc0] sm:$0xff]
  %v38 = vld [vmem:[%s0 + $0xc8] sm:$0xff]
  %v39 = vld [vmem:[%s0 + $0xd0] sm:$0xff]
  %v40 = vld [vmem:[%s0 + $0xd8] sm:$0xff]
  %v41 = vld [vmem:[%s0 + $0xe0] sm:$0xff]
  %v42 = vld [vmem:[%s0 + $0xe8] sm:$0xff]
  %v43 = vld [vmem:[%s0 + $0xf0] sm:$0xff]
  %v44 = vld [vmem:[%s0 + $0xf8] sm:$0xff]
  %v45 = vld [vmem:[%s0 + $0x100] sm:$0xff]
  %v46 = vld [vmem:[%s0 + $0x108] sm:$0xff]
  %v47 = vld [vmem:[%s0 + $0x110] sm:$0xff]
  %v48 = vld [vmem:[%s0 + $0x118] sm:$0xff]
  %v49 = vld [vmem:[%s0 + $0x120] sm:$0xff]
  %v50 = vld [vmem:[%s0 + $0x128] sm:$0xff]
  %v51 = vld [vmem:[%s0 + $0x130] sm:$0xff]
  %v52 = vld [vmem:[%s0 + $0x138] sm:$0xff]
  %v53 = vld [vmem:[%s0 + $0x140] sm:$0xff]
  %v54 = vld [vmem:[%s0 + $0x148] sm:$0xff]
  %v55 = vld [vmem:[%s0 + $0x150] sm:$0xff]
  %v56 = vld [vmem:[%s0 + $0x158] sm:$0xff]
  %v57 = vld [vmem:[%s0 + $0x160] sm:$0xff]
  %v58 = vld [vmem:[%s0 + $0x168] sm:$0xff]
  %v59 = vld [vmem:[%s0 + $0x170] sm:$0xff]
  %v60 = vld [vmem:[%s0 + $0x178] sm:$0xff]
  %v61 = vld [vmem:[%s0 + $0x180] sm:$0xff]
  %v62 = vld [vmem:[%s0 + $0x188] sm:$0xff]
  %v63 = vld [vmem:[%s0 + $0x190] sm:$0xff]
  %v64 = vld [vmem:[%s0 + $0x198] sm:$0xff]
  %v65 = vld [vmem:[%s0 + $0x1a0] sm:$0xff]
  %v66 = vld [vmem:[%s0 + $0x1a8] sm:$0xff]
  %v67 = vld [vmem:[%s0 + $0x1b0] sm:$0xff]
  %v68 = vld [vmem:[%s0 + $0x1b8] sm:$0xff]
  %v69 = vld [vmem:[%s0 + $0x1c0] sm:$0xff]
  %v70 = vld [vmem:[%s0 + $0x1c8] sm:$0xff]
  %v71 = vld [vmem:[%s0 + $0x1d0] sm:$0xff]
  %v72 = vld [vmem:[%s0 + $0x1d8] sm:$0xff]
  %v73 = vld [vmem:[%s0 + $0x1e0] sm:$0xff]
  %v74 = vld [vmem:[%s0 + $0x1e8] sm:$0xff]
  %v75 = vld [vmem:[%s0 + $0x1f0] sm:$0xff]
  %v76 = vld [vmem:[%s0 + $0x1f8] sm:$0xff]
  %v77 = vld [vmem:[%s1] sm:$0xff]
  %v78 = vld [vmem:[%s1 + $0x8] sm:$0xff]
  %v79 = vld [vmem:[%s1 + $0x10] sm:$0xff]
  %v80 = vld [vmem:[%s1 + $0x18] sm:$0xff]
  %v81 = vld [vmem:[%s1 + $0x20] sm:$0xff]
  %vm82 = vcmask 326656
  %v84 = vsel %vm82, %v13, 0
  %v87 = vsel %vm82, %v14, 0
  %v90 = vsel %vm82, %v15, 0
  %v93 = vsel %vm82, %v16, 0
  %v96 = vsel %vm82, %v17, 0
  %v99 = vsel %vm82, %v18, 0
  %v102 = vsel %vm82, %v19, 0
  %v105 = vsel %vm82, %v20, 0
  %v108 = vsel %vm82, %v21, 0
  %v111 = vsel %vm82, %v22, 0
  %v114 = vsel %vm82, %v23, 0
  %v117 = vsel %vm82, %v24, 0
  %v120 = vsel %vm82, %v25, 0
  %v123 = vsel %vm82, %v26, 0
  %v126 = vsel %vm82, %v27, 0
  %v129 = vsel %vm82, %v28, 0
  %v132 = vsel %vm82, %v29, 0
  %v135 = vsel %vm82, %v30, 0
  %v138 = vsel %vm82, %v31, 0
  %v141 = vsel %vm82, %v32, 0
  %v144 = vsel %vm82, %v33, 0
  %v147 = vsel %vm82, %v34, 0
  %v150 = vsel %vm82, %v35, 0
  %v153 = vsel %vm82, %v36, 0
  %v156 = vsel %vm82, %v37, 0
  %v159 = vsel %vm82, %v38, 0
  %v162 = vsel %vm82, %v39, 0
  %v165 = vsel %vm82, %v40, 0
  %v168 = vsel %vm82, %v41, 0
  %v171 = vsel %vm82, %v42, 0
  %v174 = vsel %vm82, %v43, 0
  %v177 = vsel %vm82, %v44, 0
  %v180 = vsel %vm82, %v45, 0
  %v183 = vsel %vm82, %v46, 0
  %v186 = vsel %vm82, %v47, 0
  %v189 = vsel %vm82, %v48, 0
  %v192 = vsel %vm82, %v49, 0
  %v195 = vsel %vm82, %v50, 0
  %v198 = vsel %vm82, %v51, 0
  %v201 = vsel %vm82, %v52, 0
  %v204 = vsel %vm82, %v53, 0
  %v207 = vsel %vm82, %v54, 0
  %v210 = vsel %vm82, %v55, 0
  %v213 = vsel %vm82, %v56, 0
  %v216 = vsel %vm82, %v57, 0
  %v219 = vsel %vm82, %v58, 0
  %v222 = vsel %vm82, %v59, 0
  %v225 = vsel %vm82, %v60, 0
  %v228 = vsel %vm82, %v61, 0
  %v231 = vsel %vm82, %v62, 0
  %v234 = vsel %vm82, %v63, 0
  %v237 = vsel %vm82, %v64, 0
  %v240 = vsel %vm82, %v65, 0
  %v243 = vsel %vm82, %v66, 0
  %v246 = vsel %vm82, %v67, 0
  %v249 = vsel %vm82, %v68, 0
  %v252 = vsel %vm82, %v69, 0
  %v255 = vsel %vm82, %v70, 0
  %v258 = vsel %vm82, %v71, 0
  %v261 = vsel %vm82, %v72, 0
  %v264 = vsel %vm82, %v73, 0
  %v267 = vsel %vm82, %v74, 0
  %v270 = vsel %vm82, %v75, 0
  %v273 = vsel %vm82, %v76, 0
  %275 = vmatprep.subr.mxu0 0.0
  %276 = vmatpush1.msra.mxu0 %v77
  %277 = vmatprep.subr.mxu0 0.0
  %278 = vmatpush1.msra.mxu0 %v78
  %279 = vmatprep.subr.mxu0 0.0
  %280 = vmatpush1.msra.mxu0 %v79
  %281 = vmatprep.subr.mxu0 0.0
  %282 = vmatpush1.msra.mxu0 %v80
  %283 = vmatprep.subr.mxu0 0.0
  %284 = vmatpush1.msra.mxu0 %v81
  %285 = vmatprep.subr.mxu0 0.0
  %286 = vmatpush1.msra.mxu0 0.0
  %287 = vmatprep.subr.mxu0 0.0
  %288 = vmatpush1.msra.mxu0 0.0
  %289 = vmatprep.subr.mxu0 0.0
  %290 = vmatpush1.msra.mxu0 0.0
  %291 = vmatprep.subr.mxu0 0.0
  %292 = vmatpush1.msra.mxu0 0.0
  %293 = vmatprep.subr.mxu0 0.0
  %294 = vmatpush1.msra.mxu0 0.0
  %295 = vmatprep.subr.mxu0 0.0
  %296 = vmatpush1.msra.mxu0 0.0
  %297 = vmatprep.subr.mxu0 0.0
  %298 = vmatpush1.msra.mxu0 0.0
  %299 = vmatprep.subr.mxu0 0.0
  %300 = vmatpush1.msra.mxu0 0.0
  %301 = vmatprep.subr.mxu0 0.0
  %302 = vmatpush1.msra.mxu0 0.0
  %303 = vmatprep.subr.mxu0 0.0
  %304 = vmatpush1.msra.mxu0 0.0
  %305 = vmatprep.subr.mxu0 0.0
  %306 = vmatpush1.msra.mxu0 0.0
  %307 = vmatprep.subr.mxu0 0.0
  %308 = vmatpush1.msra.mxu0 0.0
  %309 = vmatprep.subr.mxu0 0.0
  %310 = vmatpush1.msra.mxu0 0.0
  %311 = vmatprep.subr.mxu0 0.0
  %312 = vmatpush1.msra.mxu0 0.0
  %313 = vmatprep.subr.mxu0 0.0
  %314 = vmatpush1.msra.mxu0 0.0
  %315 = vmatprep.subr.mxu0 0.0
  %316 = vmatpush1.msra.mxu0 0.0
  %317 = vmatprep.subr.mxu0 0.0
  %318 = vmatpush1.msra.mxu0 0.0
  %319 = vmatprep.subr.mxu0 0.0
  %320 = vmatpush1.msra.mxu0 0.0
  %321 = vmatprep.subr.mxu0 0.0
  %322 = vmatpush1.msra.mxu0 0.0
  %323 = vmatprep.subr.mxu0 0.0
  %324 = vmatpush1.msra.mxu0 0.0
  %325 = vmatprep.subr.mxu0 0.0
  %326 = vmatpush1.msra.mxu0 0.0
  %327 = vmatprep.subr.mxu0 0.0
  %328 = vmatpush1.msra.mxu0 0.0
  %329 = vmatprep.subr.mxu0 0.0
  %330 = vmatpush1.msra.mxu0 0.0
  %331 = vmatprep.subr.mxu0 0.0
  %332 = vmatpush1.msra.mxu0 0.0
  %333 = vmatprep.subr.mxu0 0.0
  %334 = vmatpush1.msra.mxu0 0.0
  %335 = vmatprep.subr.mxu0 0.0
  %336 = vmatpush1.msra.mxu0 0.0
  %337 = vmatprep.subr.mxu0 0.0
  %338 = vmatpush1.msra.mxu0 0.0
  %339 = vmatprep.mubr.f32.mxu0 0.0
  %340 = vmatmul.mubr.f32.gmra.mrb[0].mxu0 %v84
  %v341 = vpop.f32.mrb[0].mxu0
  %v342 = vadd.f32 0.0, %v341
  %v343 = vpop.f32.mrb[0].mxu0
  %344 = vmatprep.mubr.f32.mxu0 0.0
  %345 = vmatmul.mubr.f32.gmra.mrb[0].mxu0 %v87
  %v346 = vpop.f32.mrb[0].mxu0
  %v347 = vadd.f32 0.0, %v346
  %v348 = vpop.f32.mrb[0].mxu0
  %349 = vmatprep.mubr.f32.mxu0 0.0
  %350 = vmatmul.mubr.f32.gmra.mrb[0].mxu0 %v90
  %v351 = vpop.f32.mrb[0].mxu0
  %v352 = vadd.f32 0.0, %v351
  %v353 = vpop.f32.mrb[0].mxu0
  %354 = vmatprep.mubr.f32.mxu0 0.0
  %355 = vmatmul.mubr.f32.gmra.mrb[0].mxu0 %v93
  %v356 = vpop.f32.mrb[0].mxu0
  %v357 = vadd.f32 0.0, %v356
  %v358 = vpop.f32.mrb[0].mxu0
  %359 = vmatprep.mubr.f32.mxu0 0.0
  %360 = vmatmul.mubr.f32.gmra.mrb[0].mxu0 %v96
  %v361 = vpop.f32.mrb[0].mxu0
  %v362 = vadd.f32 0.0, %v361
  %v363 = vpop.f32.mrb[0].mxu0
  %364 = vmatprep.mubr.f32.mxu0 0.0
  %365 = vmatmul.mubr.f32.gmra.mrb[0].mxu0 %v99
  %v366 = vpop.f32.mrb[0].mxu0
  %v367 = vadd.f32 0.0, %v366
  %v368 = vpop.f32.mrb[0].mxu0
  %369 = vmatprep.mubr.f32.mxu0 0.0
  %370 = vmatmul.mubr.f32.gmra.mrb[0].mxu0 %v102
  %v371 = vpop.f32.mrb[0].mxu0
  %v372 = vadd.f32 0.0, %v371
  %v373 = vpop.f32.mrb[0].mxu0
  %374 = vmatprep.mubr.f32.mxu0 0.0
  %375 = vmatmul.mubr.f32.gmra.mrb[0].mxu0 %v105
  %v376 = vpop.f32.mrb[0].mxu0
  %v377 = vadd.f32 0.0, %v376
  %v378 = vpop.f32.mrb[0].mxu0
  %379 = vmatprep.mubr.f32.mxu0 0.0
  %380 = vmatmul.mubr.f32.gmra.mrb[0].mxu0 %v108
  %v381 = vpop.f32.mrb[0].mxu0
  %v382 = vadd.f32 0.0, %v381
  %v383 = vpop.f32.mrb[0].mxu0
  %384 = vmatprep.mubr.f32.mxu0 0.0
  %385 = vmatmul.mubr.f32.gmra.mrb[0].mxu0 %v111
  %v386 = vpop.f32.mrb[0].mxu0
  %v387 = vadd.f32 0.0, %v386
  %v388 = vpop.f32.mrb[0].mxu0
  %389 = vmatprep.mubr.f32.mxu0 0.0
  %390 = vmatmul.mubr.f32.gmra.mrb[0].mxu0 %v114
  %v391 = vpop.f32.mrb[0].mxu0
  %v392 = vadd.f32 0.0, %v391
  %v393 = vpop.f32.mrb[0].mxu0
  %394 = vmatprep.mubr.f32.mxu0 0.0
  %395 = vmatmul.mubr.f32.gmra.mrb[0].mxu0 %v117
  %v396 = vpop.f32.mrb[0].mxu0
  %v397 = vadd.f32 0.0, %v396
  %v398 = vpop.f32.mrb[0].mxu0
  %399 = vmatprep.mubr.f32.mxu0 0.0
  %400 = vmatmul.mubr.f32.gmra.mrb[0].mxu0 %v120
  %v401 = vpop.f32.mrb[0].mxu0
  %v402 = vadd.f32 0.0, %v401
  %v403 = vpop.f32.mrb[0].mxu0
  %404 = vmatprep.mubr.f32.mxu0 0.0
  %405 = vmatmul.mubr.f32.gmra.mrb[0].mxu0 %v123
  %v406 = vpop.f32.mrb[0].mxu0
  %v407 = vadd.f32 0.0, %v406
  %v408 = vpop.f32.mrb[0].mxu0
  %409 = vmatprep.mubr.f32.mxu0 0.0
  %410 = vmatmul.mubr.f32.gmra.mrb[0].mxu0 %v126
  %v411 = vpop.f32.mrb[0].mxu0
  %v412 = vadd.f32 0.0, %v411
  %v413 = vpop.f32.mrb[0].mxu0
  %414 = vmatprep.mubr.f32.mxu0 0.0
  %415 = vmatmul.mubr.f32.gmra.mrb[0].mxu0 %v129
  %v416 = vpop.f32.mrb[0].mxu0
  %v417 = vadd.f32 0.0, %v416
  %v418 = vpop.f32.mrb[0].mxu0
  %419 = vmatprep.mubr.f32.mxu0 0.0
  %420 = vmatmul.mubr.f32.gmra.mrb[0].mxu0 %v132
  %v421 = vpop.f32.mrb[0].mxu0
  %v422 = vadd.f32 0.0, %v421
  %v423 = vpop.f32.mrb[0].mxu0
  %424 = vmatprep.mubr.f32.mxu0 0.0
  %425 = vmatmul.mubr.f32.gmra.mrb[0].mxu0 %v135
  %v426 = vpop.f32.mrb[0].mxu0
  %v427 = vadd.f32 0.0, %v426
  %v428 = vpop.f32.mrb[0].mxu0
  %429 = vmatprep.mubr.f32.mxu0 0.0
  %430 = vmatmul.mubr.f32.gmra.mrb[0].mxu0 %v138
  %v431 = vpop.f32.mrb[0].mxu0
  %v432 = vadd.f32 0.0, %v431
  %v433 = vpop.f32.mrb[0].mxu0
  %434 = vmatprep.mubr.f32.mxu0 0.0
  %435 = vmatmul.mubr.f32.gmra.mrb[0].mxu0 %v141
  %v436 = vpop.f32.mrb[0].mxu0
  %v437 = vadd.f32 0.0, %v436
  %v438 = vpop.f32.mrb[0].mxu0
  %439 = vmatprep.mubr.f32.mxu0 0.0
  %440 = vmatmul.mubr.f32.gmra.mrb[0].mxu0 %v144
  %v441 = vpop.f32.mrb[0].mxu0
  %v442 = vadd.f32 0.0, %v441
  %v443 = vpop.f32.mrb[0].mxu0
  %444 = vmatprep.mubr.f32.mxu0 0.0
  %445 = vmatmul.mubr.f32.gmra.mrb[0].mxu0 %v147
  %v446 = vpop.f32.mrb[0].mxu0
  %v447 = vadd.f32 0.0, %v446
  %v448 = vpop.f32.mrb[0].mxu0
  %449 = vmatprep.mubr.f32.mxu0 0.0
  %450 = vmatmul.mubr.f32.gmra.mrb[0].mxu0 %v150
  %v451 = vpop.f32.mrb[0].mxu0
  %v452 = vadd.f32 0.0, %v451
  %v453 = vpop.f32.mrb[0].mxu0
  %454 = vmatprep.mubr.f32.mxu0 0.0
  %455 = vmatmul.mubr.f32.gmra.mrb[0].mxu0 %v153
  %v456 = vpop.f32.mrb[0].mxu0
  %v457 = vadd.f32 0.0, %v456
  %v458 = vpop.f32.mrb[0].mxu0
  %459 = vmatprep.mubr.f32.mxu0 0.0
  %460 = vmatmul.mubr.f32.gmra.mrb[0].mxu0 %v156
  %v461 = vpop.f32.mrb[0].mxu0
  %v462 = vadd.f32 0.0, %v461
  %v463 = vpop.f32.mrb[0].mxu0
  %464 = vmatprep.mubr.f32.mxu0 0.0
  %465 = vmatmul.mubr.f32.gmra.mrb[0].mxu0 %v159
  %v466 = vpop.f32.mrb[0].mxu0
  %v467 = vadd.f32 0.0, %v466
  %v468 = vpop.f32.mrb[0].mxu0
  %469 = vmatprep.mubr.f32.mxu0 0.0
  %470 = vmatmul.mubr.f32.gmra.mrb[0].mxu0 %v162
  %v471 = vpop.f32.mrb[0].mxu0
  %v472 = vadd.f32 0.0, %v471
  %v473 = vpop.f32.mrb[0].mxu0
  %474 = vmatprep.mubr.f32.mxu0 0.0
  %475 = vmatmul.mubr.f32.gmra.mrb[0].mxu0 %v165
  %v476 = vpop.f32.mrb[0].mxu0
  %v477 = vadd.f32 0.0, %v476
  %v478 = vpop.f32.mrb[0].mxu0
  %479 = vmatprep.mubr.f32.mxu0 0.0
  %480 = vmatmul.mubr.f32.gmra.mrb[0].mxu0 %v168
  %v481 = vpop.f32.mrb[0].mxu0
  %v482 = vadd.f32 0.0, %v481
  %v483 = vpop.f32.mrb[0].mxu0
  %484 = vmatprep.mubr.f32.mxu0 0.0
  %485 = vmatmul.mubr.f32.gmra.mrb[0].mxu0 %v171
  %v486 = vpop.f32.mrb[0].mxu0
  %v487 = vadd.f32 0.0, %v486
  %v488 = vpop.f32.mrb[0].mxu0
  %489 = vmatprep.mubr.f32.mxu0 0.0
  %490 = vmatmul.mubr.f32.gmra.mrb[0].mxu0 %v174
  %v491 = vpop.f32.mrb[0].mxu0
  %v492 = vadd.f32 0.0, %v491
  %v493 = vpop.f32.mrb[0].mxu0
  %494 = vmatprep.mubr.f32.mxu0 0.0
  %495 = vmatmul.mubr.f32.gmra.mrb[0].mxu0 %v177
  %v496 = vpop.f32.mrb[0].mxu0
  %v497 = vadd.f32 0.0, %v496
  %v498 = vpop.f32.mrb[0].mxu0
  %499 = vmatprep.mubr.f32.mxu0 0.0
  %500 = vmatmul.mubr.f32.gmra.mrb[0].mxu0 %v180
  %v501 = vpop.f32.mrb[0].mxu0
  %v502 = vadd.f32 0.0, %v501
  %v503 = vpop.f32.mrb[0].mxu0
  %504 = vmatprep.mubr.f32.mxu0 0.0
  %505 = vmatmul.mubr.f32.gmra.mrb[0].mxu0 %v183
  %v506 = vpop.f32.mrb[0].mxu0
  %v507 = vadd.f32 0.0, %v506
  %v508 = vpop.f32.mrb[0].mxu0
  %509 = vmatprep.mubr.f32.mxu0 0.0
  %510 = vmatmul.mubr.f32.gmra.mrb[0].mxu0 %v186
  %v511 = vpop.f32.mrb[0].mxu0
  %v512 = vadd.f32 0.0, %v511
  %v513 = vpop.f32.mrb[0].mxu0
  %514 = vmatprep.mubr.f32.mxu0 0.0
  %515 = vmatmul.mubr.f32.gmra.mrb[0].mxu0 %v189
  %v516 = vpop.f32.mrb[0].mxu0
  %v517 = vadd.f32 0.0, %v516
  %v518 = vpop.f32.mrb[0].mxu0
  %519 = vmatprep.mubr.f32.mxu0 0.0
  %520 = vmatmul.mubr.f32.gmra.mrb[0].mxu0 %v192
  %v521 = vpop.f32.mrb[0].mxu0
  %v522 = vadd.f32 0.0, %v521
  %v523 = vpop.f32.mrb[0].mxu0
  %524 = vmatprep.mubr.f32.mxu0 0.0
  %525 = vmatmul.mubr.f32.gmra.mrb[0].mxu0 %v195
  %v526 = vpop.f32.mrb[0].mxu0
  %v527 = vadd.f32 0.0, %v526
  %v528 = vpop.f32.mrb[0].mxu0
  %529 = vmatprep.mubr.f32.mxu0 0.0
  %530 = vmatmul.mubr.f32.gmra.mrb[0].mxu0 %v198
  %v531 = vpop.f32.mrb[0].mxu0
  %v532 = vadd.f32 0.0, %v531
  %v533 = vpop.f32.mrb[0].mxu0
  %534 = vmatprep.mubr.f32.mxu0 0.0
  %535 = vmatmul.mubr.f32.gmra.mrb[0].mxu0 %v201
  %v536 = vpop.f32.mrb[0].mxu0
  %v537 = vadd.f32 0.0, %v536
  %v538 = vpop.f32.mrb[0].mxu0
  %539 = vmatprep.mubr.f32.mxu0 0.0
  %540 = vmatmul.mubr.f32.gmra.mrb[0].mxu0 %v204
  %v541 = vpop.f32.mrb[0].mxu0
  %v542 = vadd.f32 0.0, %v541
  %v543 = vpop.f32.mrb[0].mxu0
  %544 = vmatprep.mubr.f32.mxu0 0.0
  %545 = vmatmul.mubr.f32.gmra.mrb[0].mxu0 %v207
  %v546 = vpop.f32.mrb[0].mxu0
  %v547 = vadd.f32 0.0, %v546
  %v548 = vpop.f32.mrb[0].mxu0
  %549 = vmatprep.mubr.f32.mxu0 0.0
  %550 = vmatmul.mubr.f32.gmra.mrb[0].mxu0 %v210
  %v551 = vpop.f32.mrb[0].mxu0
  %v552 = vadd.f32 0.0, %v551
  %v553 = vpop.f32.mrb[0].mxu0
  %554 = vmatprep.mubr.f32.mxu0 0.0
  %555 = vmatmul.mubr.f32.gmra.mrb[0].mxu0 %v213
  %v556 = vpop.f32.mrb[0].mxu0
  %v557 = vadd.f32 0.0, %v556
  %v558 = vpop.f32.mrb[0].mxu0
  %559 = vmatprep.mubr.f32.mxu0 0.0
  %560 = vmatmul.mubr.f32.gmra.mrb[0].mxu0 %v216
  %v561 = vpop.f32.mrb[0].mxu0
  %v562 = vadd.f32 0.0, %v561
  %v563 = vpop.f32.mrb[0].mxu0
  %564 = vmatprep.mubr.f32.mxu0 0.0
  %565 = vmatmul.mubr.f32.gmra.mrb[0].mxu0 %v219
  %v566 = vpop.f32.mrb[0].mxu0
  %v567 = vadd.f32 0.0, %v566
  %v568 = vpop.f32.mrb[0].mxu0
  %569 = vmatprep.mubr.f32.mxu0 0.0
  %570 = vmatmul.mubr.f32.gmra.mrb[0].mxu0 %v222
  %v571 = vpop.f32.mrb[0].mxu0
  %v572 = vadd.f32 0.0, %v571
  %v573 = vpop.f32.mrb[0].mxu0
  %574 = vmatprep.mubr.f32.mxu0 0.0
  %575 = vmatmul.mubr.f32.gmra.mrb[0].mxu0 %v225
  %v576 = vpop.f32.mrb[0].mxu0
  %v577 = vadd.f32 0.0, %v576
  %v578 = vpop.f32.mrb[0].mxu0
  %579 = vmatprep.mubr.f32.mxu0 0.0
  %580 = vmatmul.mubr.f32.gmra.mrb[0].mxu0 %v228
  %v581 = vpop.f32.mrb[0].mxu0
  %v582 = vadd.f32 0.0, %v581
  %v583 = vpop.f32.mrb[0].mxu0
  %584 = vmatprep.mubr.f32.mxu0 0.0
  %585 = vmatmul.mubr.f32.gmra.mrb[0].mxu0 %v231
  %v586 = vpop.f32.mrb[0].mxu0
  %v587 = vadd.f32 0.0, %v586
  %v588 = vpop.f32.mrb[0].mxu0
  %589 = vmatprep.mubr.f32.mxu0 0.0
  %590 = vmatmul.mubr.f32.gmra.mrb[0].mxu0 %v234
  %v591 = vpop.f32.mrb[0].mxu0
  %v592 = vadd.f32 0.0, %v591
  %v593 = vpop.f32.mrb[0].mxu0
  %594 = vmatprep.mubr.f32.mxu0 0.0
  %595 = vmatmul.mubr.f32.gmra.mrb[0].mxu0 %v237
  %v596 = vpop.f32.mrb[0].mxu0
  %v597 = vadd.f32 0.0, %v596
  %v598 = vpop.f32.mrb[0].mxu0
  %599 = vmatprep.mubr.f32.mxu0 0.0
  %600 = vmatmul.mubr.f32.gmra.mrb[0].mxu0 %v240
  %v601 = vpop.f32.mrb[0].mxu0
  %v602 = vadd.f32 0.0, %v601
  %v603 = vpop.f32.mrb[0].mxu0
  %604 = vmatprep.mubr.f32.mxu0 0.0
  %605 = vmatmul.mubr.f32.gmra.mrb[0].mxu0 %v243
  %v606 = vpop.f32.mrb[0].mxu0
  %v607 = vadd.f32 0.0, %v606
  %v608 = vpop.f32.mrb[0].mxu0
  %609 = vmatprep.mubr.f32.mxu0 0.0
  %610 = vmatmul.mubr.f32.gmra.mrb[0].mxu0 %v246
  %v611 = vpop.f32.mrb[0].mxu0
  %v612 = vadd.f32 0.0, %v611
  %v613 = vpop.f32.mrb[0].mxu0
  %614 = vmatprep.mubr.f32.mxu0 0.0
  %615 = vmatmul.mubr.f32.gmra.mrb[0].mxu0 %v249
  %v616 = vpop.f32.mrb[0].mxu0
  %v617 = vadd.f32 0.0, %v616
  %v618 = vpop.f32.mrb[0].mxu0
  %619 = vmatprep.mubr.f32.mxu0 0.0
  %620 = vmatmul.mubr.f32.gmra.mrb[0].mxu0 %v252
  %v621 = vpop.f32.mrb[0].mxu0
  %v622 = vadd.f32 0.0, %v621
  %v623 = vpop.f32.mrb[0].mxu0
  %624 = vmatprep.mubr.f32.mxu0 0.0
  %625 = vmatmul.mubr.f32.gmra.mrb[0].mxu0 %v255
  %v626 = vpop.f32.mrb[0].mxu0
  %v627 = vadd.f32 0.0, %v626
  %v628 = vpop.f32.mrb[0].mxu0
  %629 = vmatprep.mubr.f32.mxu0 0.0
  %630 = vmatmul.mubr.f32.gmra.mrb[0].mxu0 %v258
  %v631 = vpop.f32.mrb[0].mxu0
  %v632 = vadd.f32 0.0, %v631
  %v633 = vpop.f32.mrb[0].mxu0
  %634 = vmatprep.mubr.f32.mxu0 0.0
  %635 = vmatmul.mubr.f32.gmra.mrb[0].mxu0 %v261
  %v636 = vpop.f32.mrb[0].mxu0
  %v637 = vadd.f32 0.0, %v636
  %v638 = vpop.f32.mrb[0].mxu0
  %639 = vmatprep.mubr.f32.mxu0 0.0
  %640 = vmatmul.mubr.f32.gmra.mrb[0].mxu0 %v264
  %v641 = vpop.f32.mrb[0].mxu0
  %v642 = vadd.f32 0.0, %v641
  %v643 = vpop.f32.mrb[0].mxu0
  %644 = vmatprep.mubr.f32.mxu0 0.0
  %645 = vmatmul.mubr.f32.gmra.mrb[0].mxu0 %v267
  %v646 = vpop.f32.mrb[0].mxu0
  %v647 = vadd.f32 0.0, %v646
  %v648 = vpop.f32.mrb[0].mxu0
  %649 = vmatprep.mubr.f32.mxu0 0.0
  %650 = vmatmul.mubr.f32.gmra.mrb[0].mxu0 %v270
  %v651 = vpop.f32.mrb[0].mxu0
  %v652 = vadd.f32 0.0, %v651
  %v653 = vpop.f32.mrb[0].mxu0
  %654 = vmatprep.mubr.f32.mxu0 0.0
  %655 = vmatmul.mubr.f32.gmra.mrb[0].mxu0 %v273
  %v656 = vpop.f32.mrb[0].mxu0
  %v657 = vadd.f32 0.0, %v656
  %v658 = vpop.f32.mrb[0].mxu0
  %659 = vdwg.mxu0
  %v660 = vadd.f32 %v342, %v347
  %v661 = vadd.f32 %v660, %v352
  %v662 = vadd.f32 %v661, %v357
  %v663 = vadd.f32 %v662, %v362
  %v664 = vadd.f32 %v663, %v367
  %v665 = vadd.f32 %v664, %v372
  %v666 = vadd.f32 %v665, %v377
  %v667 = vadd.f32 %v666, %v382
  %v668 = vadd.f32 %v667, %v387
  %v669 = vadd.f32 %v668, %v392
  %v670 = vadd.f32 %v669, %v397
  %v671 = vadd.f32 %v670, %v402
  %v672 = vadd.f32 %v671, %v407
  %v673 = vadd.f32 %v672, %v412
  %v674 = vadd.f32 %v673, %v417
  %v675 = vadd.f32 %v674, %v422
  %v676 = vadd.f32 %v675, %v427
  %v677 = vadd.f32 %v676, %v432
  %v678 = vadd.f32 %v677, %v437
  %v679 = vadd.f32 %v678, %v442
  %v680 = vadd.f32 %v679, %v447
  %v681 = vadd.f32 %v680, %v452
  %v682 = vadd.f32 %v681, %v457
  %v683 = vadd.f32 %v682, %v462
  %v684 = vadd.f32 %v683, %v467
  %v685 = vadd.f32 %v684, %v472
  %v686 = vadd.f32 %v685, %v477
  %v687 = vadd.f32 %v686, %v482
  %v688 = vadd.f32 %v687, %v487
  %v689 = vadd.f32 %v688, %v492
  %v690 = vadd.f32 %v689, %v497
  %v691 = vadd.f32 %v690, %v502
  %v692 = vadd.f32 %v691, %v507
  %v693 = vadd.f32 %v692, %v512
  %v694 = vadd.f32 %v693, %v517
  %v695 = vadd.f32 %v694, %v522
  %v696 = vadd.f32 %v695, %v527
  %v697 = vadd.f32 %v696, %v532
  %v698 = vadd.f32 %v697, %v537
  %v699 = vadd.f32 %v698, %v542
  %v700 = vadd.f32 %v699, %v547
  %v701 = vadd.f32 %v700, %v552
  %v702 = vadd.f32 %v701, %v557
  %v703 = vadd.f32 %v702, %v562
  %v704 = vadd.f32 %v703, %v567
  %v705 = vadd.f32 %v704, %v572
  %v706 = vadd.f32 %v705, %v577
  %v707 = vadd.f32 %v706, %v582
  %v708 = vadd.f32 %v707, %v587
  %v709 = vadd.f32 %v708, %v592
  %v710 = vadd.f32 %v709, %v597
  %v711 = vadd.f32 %v710, %v602
  %v712 = vadd.f32 %v711, %v607
  %v713 = vadd.f32 %v712, %v612
  %v714 = vadd.f32 %v713, %v617
  %v715 = vadd.f32 %v714, %v622
  %v716 = vadd.f32 %v715, %v627
  %v717 = vadd.f32 %v716, %v632
  %v718 = vadd.f32 %v717, %v637
  %v719 = vadd.f32 %v718, %v642
  %v720 = vadd.f32 %v719, %v647
  %v721 = vadd.f32 %v720, %v652
  %v722 = vadd.f32 %v721, %v657
  %v723 = vrot.slane %v722, 4
  %v724 = vadd.f32 %v722, %v723
  %v725 = vrot.slane %v724, 2
  %v726 = vadd.f32 %v724, %v725
  %v727 = vrot.slane %v726, 1
  %v728 = vadd.f32 %v726, %v727
  %729 = vst [vmem:[%s2] sm:$0x1] %v728
  %v730 = vmul.f32 %v342, %v342
  %v731 = vmul.f32 %v347, %v347
  %v732 = vmul.f32 %v352, %v352
  %v733 = vmul.f32 %v357, %v357
  %v734 = vmul.f32 %v362, %v362
  %v735 = vmul.f32 %v367, %v367
  %v736 = vmul.f32 %v372, %v372
  %v737 = vmul.f32 %v377, %v377
  %v738 = vmul.f32 %v382, %v382
  %v739 = vmul.f32 %v387, %v387
  %v740 = vmul.f32 %v392, %v392
  %v741 = vmul.f32 %v397, %v397
  %v742 = vmul.f32 %v402, %v402
  %v743 = vmul.f32 %v407, %v407
  %v744 = vmul.f32 %v412, %v412
  %v745 = vmul.f32 %v417, %v417
  %v746 = vmul.f32 %v422, %v422
  %v747 = vmul.f32 %v427, %v427
  %v748 = vmul.f32 %v432, %v432
  %v749 = vmul.f32 %v437, %v437
  %v750 = vmul.f32 %v442, %v442
  %v751 = vmul.f32 %v447, %v447
  %v752 = vmul.f32 %v452, %v452
  %v753 = vmul.f32 %v457, %v457
  %v754 = vmul.f32 %v462, %v462
  %v755 = vmul.f32 %v467, %v467
  %v756 = vmul.f32 %v472, %v472
  %v757 = vmul.f32 %v477, %v477
  %v758 = vmul.f32 %v482, %v482
  %v759 = vmul.f32 %v487, %v487
  %v760 = vmul.f32 %v492, %v492
  %v761 = vmul.f32 %v497, %v497
  %v762 = vmul.f32 %v502, %v502
  %v763 = vmul.f32 %v507, %v507
  %v764 = vmul.f32 %v512, %v512
  %v765 = vmul.f32 %v517, %v517
  %v766 = vmul.f32 %v522, %v522
  %v767 = vmul.f32 %v527, %v527
  %v768 = vmul.f32 %v532, %v532
  %v769 = vmul.f32 %v537, %v537
  %v770 = vmul.f32 %v542, %v542
  %v771 = vmul.f32 %v547, %v547
  %v772 = vmul.f32 %v552, %v552
  %v773 = vmul.f32 %v557, %v557
  %v774 = vmul.f32 %v562, %v562
  %v775 = vmul.f32 %v567, %v567
  %v776 = vmul.f32 %v572, %v572
  %v777 = vmul.f32 %v577, %v577
  %v778 = vmul.f32 %v582, %v582
  %v779 = vmul.f32 %v587, %v587
  %v780 = vmul.f32 %v592, %v592
  %v781 = vmul.f32 %v597, %v597
  %v782 = vmul.f32 %v602, %v602
  %v783 = vmul.f32 %v607, %v607
  %v784 = vmul.f32 %v612, %v612
  %v785 = vmul.f32 %v617, %v617
  %v786 = vmul.f32 %v622, %v622
  %v787 = vmul.f32 %v627, %v627
  %v788 = vmul.f32 %v632, %v632
  %v789 = vmul.f32 %v637, %v637
  %v790 = vmul.f32 %v642, %v642
  %v791 = vmul.f32 %v647, %v647
  %v792 = vmul.f32 %v652, %v652
  %v793 = vmul.f32 %v657, %v657
  %v794 = vadd.f32 %v730, %v731
  %v795 = vadd.f32 %v794, %v732
  %v796 = vadd.f32 %v795, %v733
  %v797 = vadd.f32 %v796, %v734
  %v798 = vadd.f32 %v797, %v735
  %v799 = vadd.f32 %v798, %v736
  %v800 = vadd.f32 %v799, %v737
  %v801 = vadd.f32 %v800, %v738
  %v802 = vadd.f32 %v801, %v739
  %v803 = vadd.f32 %v802, %v740
  %v804 = vadd.f32 %v803, %v741
  %v805 = vadd.f32 %v804, %v742
  %v806 = vadd.f32 %v805, %v743
  %v807 = vadd.f32 %v806, %v744
  %v808 = vadd.f32 %v807, %v745
  %v809 = vadd.f32 %v808, %v746
  %v810 = vadd.f32 %v809, %v747
  %v811 = vadd.f32 %v810, %v748
  %v812 = vadd.f32 %v811, %v749
  %v813 = vadd.f32 %v812, %v750
  %v814 = vadd.f32 %v813, %v751
  %v815 = vadd.f32 %v814, %v752
  %v816 = vadd.f32 %v815, %v753
  %v817 = vadd.f32 %v816, %v754
  %v818 = vadd.f32 %v817, %v755
  %v819 = vadd.f32 %v818, %v756
  %v820 = vadd.f32 %v819, %v757
  %v821 = vadd.f32 %v820, %v758
  %v822 = vadd.f32 %v821, %v759
  %v823 = vadd.f32 %v822, %v760
  %v824 = vadd.f32 %v823, %v761
  %v825 = vadd.f32 %v824, %v762
  %v826 = vadd.f32 %v825, %v763
  %v827 = vadd.f32 %v826, %v764
  %v828 = vadd.f32 %v827, %v765
  %v829 = vadd.f32 %v828, %v766
  %v830 = vadd.f32 %v829, %v767
  %v831 = vadd.f32 %v830, %v768
  %v832 = vadd.f32 %v831, %v769
  %v833 = vadd.f32 %v832, %v770
  %v834 = vadd.f32 %v833, %v771
  %v835 = vadd.f32 %v834, %v772
  %v836 = vadd.f32 %v835, %v773
  %v837 = vadd.f32 %v836, %v774
  %v838 = vadd.f32 %v837, %v775
  %v839 = vadd.f32 %v838, %v776
  %v840 = vadd.f32 %v839, %v777
  %v841 = vadd.f32 %v840, %v778
  %v842 = vadd.f32 %v841, %v779
  %v843 = vadd.f32 %v842, %v780
  %v844 = vadd.f32 %v843, %v781
  %v845 = vadd.f32 %v844, %v782
  %v846 = vadd.f32 %v845, %v783
  %v847 = vadd.f32 %v846, %v784
  %v848 = vadd.f32 %v847, %v785
  %v849 = vadd.f32 %v848, %v786
  %v850 = vadd.f32 %v849, %v787
  %v851 = vadd.f32 %v850, %v788
  %v852 = vadd.f32 %v851, %v789
  %v853 = vadd.f32 %v852, %v790
  %v854 = vadd.f32 %v853, %v791
  %v855 = vadd.f32 %v854, %v792
  %v856 = vadd.f32 %v855, %v793
  %v857 = vrot.slane %v856, 4
  %v858 = vadd.f32 %v856, %v857
  %v859 = vrot.slane %v858, 2
  %v860 = vadd.f32 %v858, %v859
  %v861 = vrot.slane %v860, 1
  %v862 = vadd.f32 %v860, %v861
  %863 = vst [vmem:[%s3] sm:$0x1] %v862
  // Predicated region
  $region10: #{complicated_conv_layer.2} parent=0 // pred_check
    _
  $region11: #{complicated_conv_layer.2} parent=0 // pred_check_branch
    %865 = sbr.rel (0) target = $region13
  $region12: #{complicated_conv_layer.2} parent=0 // pred_region
    _
  $region13: #{complicated_conv_layer.2} parent=0 // pred_fallthru
    _
  // Predicated region
  $region14: #{complicated_conv_layer.2} parent=0 // pred_check
    _
  $region15: #{complicated_conv_layer.2} parent=0 // pred_check_branch
    %867 = sbr.rel (0) target = $region17
  $region16: #{complicated_conv_layer.2} parent=0 // pred_region
    _
  $region17: #{complicated_conv_layer.2} parent=0 // pred_fallthru
    _
  // Predicated region
  $region18: #{complicated_conv_layer.2} parent=0 // pred_check
    _
  $region19: #{complicated_conv_layer.2} parent=0 // pred_check_branch
    %869 = sbr.rel (0) target = $region21
  $region20: #{complicated_conv_layer.2} parent=0 // pred_region
    _
  $region21: #{complicated_conv_layer.2} parent=0 // pred_fallthru
    _
  // Predicated region
  $region22: #{complicated_conv_layer.2} parent=0 // pred_check
    _
  $region23: #{complicated_conv_layer.2} parent=0 // pred_check_branch
    %871 = sbr.rel (0) target = $region25
  $region24: #{complicated_conv_layer.2} parent=0 // pred_region
    _
  $region25: #{complicated_conv_layer.2} parent=0 // pred_fallthru
    _

// kernel: complicated_conv_layer.3
$region0: #{complicated_conv_layer.3}
  #allocation0 [shape = 'u32[]', space=smem, size = 0x4, offset = 0x4, fixed_abs, tag = 'smem constant byte address 0x4 - core index']
  #allocation1 [shape = 'u32[144,128]{1,0:T(1,128)}', space=vmem, size = 0x12000, scoped, tag = 'internal scratch']
  %s0 = inlined_call_operand.vmem [shape: f32[512,40], index: 0, kind: input, shape index: {}]
  %s1 = inlined_call_operand.vmem [shape: f32[40,128], index: 1, kind: input, shape index: {}]
  %s2 = inlined_call_operand.vmem [shape: f32[1,128], index: 2, kind: input, shape index: {}]
  %s3 = inlined_call_operand.vmem [shape: f32[1,128], index: 3, kind: input, shape index: {}]
  %s4 = inlined_call_operand.vmem [shape: f32[512,128], index: 4, kind: output, shape index: {}]
  %s5 = sld [smem:[#allocation0]]
  $region26: #{complicated_conv_layer.3} parent=0
    _
  %s7 = ssub.s32 1, %s5
  %s8 = scalar_select 0, %s7, %s5
  // Predicated region
  $region2: #{complicated_conv_layer.3} parent=0 // pred_check
    _
  $region3: #{complicated_conv_layer.3} parent=0 // pred_check_branch
    %10 = sbr.rel (0) target = $region5
  $region4: #{complicated_conv_layer.3} parent=0 // pred_region
    _
  $region5: #{complicated_conv_layer.3} parent=0 // pred_fallthru
    _
  // Predicated region
  $region6: #{complicated_conv_layer.3} parent=0 // pred_check
    _
  $region7: #{complicated_conv_layer.3} parent=0 // pred_check_branch
    %12 = sbr.rel (0) target = $region9
  $region8: #{complicated_conv_layer.3} parent=0 // pred_region
    _
  $region9: #{complicated_conv_layer.3} parent=0 // pred_fallthru
    _
  // Predicated region
  $region10: #{complicated_conv_layer.3} parent=0 // pred_check
    _
  $region11: #{complicated_conv_layer.3} parent=0 // pred_check_branch
    %14 = sbr.rel (0) target = $region13
  $region12: #{complicated_conv_layer.3} parent=0 // pred_region
    _
  $region13: #{complicated_conv_layer.3} parent=0 // pred_fallthru
    _
  // Predicated region
  $region14: #{complicated_conv_layer.3} parent=0 // pred_check
    _
  $region15: #{complicated_conv_layer.3} parent=0 // pred_check_branch
    %16 = sbr.rel (0) target = $region17
  $region16: #{complicated_conv_layer.3} parent=0 // pred_region
    _
  $region17: #{complicated_conv_layer.3} parent=0 // pred_fallthru
    _
  %v17 = vld [vmem:[%s0] sm:$0xff]
  %v18 = vld [vmem:[%s0 + $0x8] sm:$0xff]
  %v19 = vld [vmem:[%s0 + $0x10] sm:$0xff]
  %v20 = vld [vmem:[%s0 + $0x18] sm:$0xff]
  %v21 = vld [vmem:[%s0 + $0x20] sm:$0xff]
  %v22 = vld [vmem:[%s0 + $0x28] sm:$0xff]
  %v23 = vld [vmem:[%s0 + $0x30] sm:$0xff]
  %v24 = vld [vmem:[%s0 + $0x38] sm:$0xff]
  %v25 = vld [vmem:[%s0 + $0x40] sm:$0xff]
  %v26 = vld [vmem:[%s0 + $0x48] sm:$0xff]
  %v27 = vld [vmem:[%s0 + $0x50] sm:$0xff]
  %v28 = vld [vmem:[%s0 + $0x58] sm:$0xff]
  %v29 = vld [vmem:[%s0 + $0x60] sm:$0xff]
  %v30 = vld [vmem:[%s0 + $0x68] sm:$0xff]
  %v31 = vld [vmem:[%s0 + $0x70] sm:$0xff]
  %v32 = vld [vmem:[%s0 + $0x78] sm:$0xff]
  %v33 = vld [vmem:[%s0 + $0x80] sm:$0xff]
  %v34 = vld [vmem:[%s0 + $0x88] sm:$0xff]
  %v35 = vld [vmem:[%s0 + $0x90] sm:$0xff]
  %v36 = vld [vmem:[%s0 + $0x98] sm:$0xff]
  %v37 = vld [vmem:[%s0 + $0xa0] sm:$0xff]
  %v38 = vld [vmem:[%s0 + $0xa8] sm:$0xff]
  %v39 = vld [vmem:[%s0 + $0xb0] sm:$0xff]
  %v40 = vld [vmem:[%s0 + $0xb8] sm:$0xff]
  %v41 = vld [vmem:[%s0 + $0xc0] sm:$0xff]
  %v42 = vld [vmem:[%s0 + $0xc8] sm:$0xff]
  %v43 = vld [vmem:[%s0 + $0xd0] sm:$0xff]
  %v44 = vld [vmem:[%s0 + $0xd8] sm:$0xff]
  %v45 = vld [vmem:[%s0 + $0xe0] sm:$0xff]
  %v46 = vld [vmem:[%s0 + $0xe8] sm:$0xff]
  %v47 = vld [vmem:[%s0 + $0xf0] sm:$0xff]
  %v48 = vld [vmem:[%s0 + $0xf8] sm:$0xff]
  %v49 = vld [vmem:[%s0 + $0x100] sm:$0xff]
  %v50 = vld [vmem:[%s0 + $0x108] sm:$0xff]
  %v51 = vld [vmem:[%s0 + $0x110] sm:$0xff]
  %v52 = vld [vmem:[%s0 + $0x118] sm:$0xff]
  %v53 = vld [vmem:[%s0 + $0x120] sm:$0xff]
  %v54 = vld [vmem:[%s0 + $0x128] sm:$0xff]
  %v55 = vld [vmem:[%s0 + $0x130] sm:$0xff]
  %v56 = vld [vmem:[%s0 + $0x138] sm:$0xff]
  %v57 = vld [vmem:[%s0 + $0x140] sm:$0xff]
  %v58 = vld [vmem:[%s0 + $0x148] sm:$0xff]
  %v59 = vld [vmem:[%s0 + $0x150] sm:$0xff]
  %v60 = vld [vmem:[%s0 + $0x158] sm:$0xff]
  %v61 = vld [vmem:[%s0 + $0x160] sm:$0xff]
  %v62 = vld [vmem:[%s0 + $0x168] sm:$0xff]
  %v63 = vld [vmem:[%s0 + $0x170] sm:$0xff]
  %v64 = vld [vmem:[%s0 + $0x178] sm:$0xff]
  %v65 = vld [vmem:[%s0 + $0x180] sm:$0xff]
  %v66 = vld [vmem:[%s0 + $0x188] sm:$0xff]
  %v67 = vld [vmem:[%s0 + $0x190] sm:$0xff]
  %v68 = vld [vmem:[%s0 + $0x198] sm:$0xff]
  %v69 = vld [vmem:[%s0 + $0x1a0] sm:$0xff]
  %v70 = vld [vmem:[%s0 + $0x1a8] sm:$0xff]
  %v71 = vld [vmem:[%s0 + $0x1b0] sm:$0xff]
  %v72 = vld [vmem:[%s0 + $0x1b8] sm:$0xff]
  %v73 = vld [vmem:[%s0 + $0x1c0] sm:$0xff]
  %v74 = vld [vmem:[%s0 + $0x1c8] sm:$0xff]
  %v75 = vld [vmem:[%s0 + $0x1d0] sm:$0xff]
  %v76 = vld [vmem:[%s0 + $0x1d8] sm:$0xff]
  %v77 = vld [vmem:[%s0 + $0x1e0] sm:$0xff]
  %v78 = vld [vmem:[%s0 + $0x1e8] sm:$0xff]
  %v79 = vld [vmem:[%s0 + $0x1f0] sm:$0xff]
  %v80 = vld [vmem:[%s0 + $0x1f8] sm:$0xff]
  %v81 = vld [vmem:[%s1] sm:$0xff]
  %v82 = vld [vmem:[%s1 + $0x8] sm:$0xff]
  %v83 = vld [vmem:[%s1 + $0x10] sm:$0xff]
  %v84 = vld [vmem:[%s1 + $0x18] sm:$0xff]
  %v85 = vld [vmem:[%s1 + $0x20] sm:$0xff]
  %vm86 = vcmask 326656
  %v88 = vsel %vm86, %v17, 0
  %v91 = vsel %vm86, %v18, 0
  %v94 = vsel %vm86, %v19, 0
  %v97 = vsel %vm86, %v20, 0
  %v100 = vsel %vm86, %v21, 0
  %v103 = vsel %vm86, %v22, 0
  %v106 = vsel %vm86, %v23, 0
  %v109 = vsel %vm86, %v24, 0
  %v112 = vsel %vm86, %v25, 0
  %v115 = vsel %vm86, %v26, 0
  %v118 = vsel %vm86, %v27, 0
  %v121 = vsel %vm86, %v28, 0
  %v124 = vsel %vm86, %v29, 0
  %v127 = vsel %vm86, %v30, 0
  %v130 = vsel %vm86, %v31, 0
  %v133 = vsel %vm86, %v32, 0
  %v136 = vsel %vm86, %v33, 0
  %v139 = vsel %vm86, %v34, 0
  %v142 = vsel %vm86, %v35, 0
  %v145 = vsel %vm86, %v36, 0
  %v148 = vsel %vm86, %v37, 0
  %v151 = vsel %vm86, %v38, 0
  %v154 = vsel %vm86, %v39, 0
  %v157 = vsel %vm86, %v40, 0
  %v160 = vsel %vm86, %v41, 0
  %v163 = vsel %vm86, %v42, 0
  %v166 = vsel %vm86, %v43, 0
  %v169 = vsel %vm86, %v44, 0
  %v172 = vsel %vm86, %v45, 0
  %v175 = vsel %vm86, %v46, 0
  %v178 = vsel %vm86, %v47, 0
  %v181 = vsel %vm86, %v48, 0
  %v184 = vsel %vm86, %v49, 0
  %v187 = vsel %vm86, %v50, 0
  %v190 = vsel %vm86, %v51, 0
  %v193 = vsel %vm86, %v52, 0
  %v196 = vsel %vm86, %v53, 0
  %v199 = vsel %vm86, %v54, 0
  %v202 = vsel %vm86, %v55, 0
  %v205 = vsel %vm86, %v56, 0
  %v208 = vsel %vm86, %v57, 0
  %v211 = vsel %vm86, %v58, 0
  %v214 = vsel %vm86, %v59, 0
  %v217 = vsel %vm86, %v60, 0
  %v220 = vsel %vm86, %v61, 0
  %v223 = vsel %vm86, %v62, 0
  %v226 = vsel %vm86, %v63, 0
  %v229 = vsel %vm86, %v64, 0
  %v232 = vsel %vm86, %v65, 0
  %v235 = vsel %vm86, %v66, 0
  %v238 = vsel %vm86, %v67, 0
  %v241 = vsel %vm86, %v68, 0
  %v244 = vsel %vm86, %v69, 0
  %v247 = vsel %vm86, %v70, 0
  %v250 = vsel %vm86, %v71, 0
  %v253 = vsel %vm86, %v72, 0
  %v256 = vsel %vm86, %v73, 0
  %v259 = vsel %vm86, %v74, 0
  %v262 = vsel %vm86, %v75, 0
  %v265 = vsel %vm86, %v76, 0
  %v268 = vsel %vm86, %v77, 0
  %v271 = vsel %vm86, %v78, 0
  %v274 = vsel %vm86, %v79, 0
  %v277 = vsel %vm86, %v80, 0
  %279 = vmatprep.subr.mxu0 0.0
  %280 = vmatpush1.msra.mxu0 %v81
  %281 = vmatprep.subr.mxu0 0.0
  %282 = vmatpush1.msra.mxu0 %v82
  %283 = vmatprep.subr.mxu0 0.0
  %284 = vmatpush1.msra.mxu0 %v83
  %285 = vmatprep.subr.mxu0 0.0
  %286 = vmatpush1.msra.mxu0 %v84
  %287 = vmatprep.subr.mxu0 0.0
  %288 = vmatpush1.msra.mxu0 %v85
  %289 = vmatprep.subr.mxu0 0.0
  %290 = vmatpush1.msra.mxu0 0.0
  %291 = vmatprep.subr.mxu0 0.0
  %292 = vmatpush1.msra.mxu0 0.0
  %293 = vmatprep.subr.mxu0 0.0
  %294 = vmatpush1.msra.mxu0 0.0
  %295 = vmatprep.subr.mxu0 0.0
  %296 = vmatpush1.msra.mxu0 0.0
  %297 = vmatprep.subr.mxu0 0.0
  %298 = vmatpush1.msra.mxu0 0.0
  %299 = vmatprep.subr.mxu0 0.0
  %300 = vmatpush1.msra.mxu0 0.0
  %301 = vmatprep.subr.mxu0 0.0
  %302 = vmatpush1.msra.mxu0 0.0
  %303 = vmatprep.subr.mxu0 0.0
  %304 = vmatpush1.msra.mxu0 0.0
  %305 = vmatprep.subr.mxu0 0.0
  %306 = vmatpush1.msra.mxu0 0.0
  %307 = vmatprep.subr.mxu0 0.0
  %308 = vmatpush1.msra.mxu0 0.0
  %309 = vmatprep.subr.mxu0 0.0
  %310 = vmatpush1.msra.mxu0 0.0
  %311 = vmatprep.subr.mxu0 0.0
  %312 = vmatpush1.msra.mxu0 0.0
  %313 = vmatprep.subr.mxu0 0.0
  %314 = vmatpush1.msra.mxu0 0.0
  %315 = vmatprep.subr.mxu0 0.0
  %316 = vmatpush1.msra.mxu0 0.0
  %317 = vmatprep.subr.mxu0 0.0
  %318 = vmatpush1.msra.mxu0 0.0
  %319 = vmatprep.subr.mxu0 0.0
  %320 = vmatpush1.msra.mxu0 0.0
  %321 = vmatprep.subr.mxu0 0.0
  %322 = vmatpush1.msra.mxu0 0.0
  %323 = vmatprep.subr.mxu0 0.0
  %324 = vmatpush1.msra.mxu0 0.0
  %325 = vmatprep.subr.mxu0 0.0
  %326 = vmatpush1.msra.mxu0 0.0
  %327 = vmatprep.subr.mxu0 0.0
  %328 = vmatpush1.msra.mxu0 0.0
  %329 = vmatprep.subr.mxu0 0.0
  %330 = vmatpush1.msra.mxu0 0.0
  %331 = vmatprep.subr.mxu0 0.0
  %332 = vmatpush1.msra.mxu0 0.0
  %333 = vmatprep.subr.mxu0 0.0
  %334 = vmatpush1.msra.mxu0 0.0
  %335 = vmatprep.subr.mxu0 0.0
  %336 = vmatpush1.msra.mxu0 0.0
  %337 = vmatprep.subr.mxu0 0.0
  %338 = vmatpush1.msra.mxu0 0.0
  %339 = vmatprep.subr.mxu0 0.0
  %340 = vmatpush1.msra.mxu0 0.0
  %341 = vmatprep.subr.mxu0 0.0
  %342 = vmatpush1.msra.mxu0 0.0
  %343 = vmatprep.mubr.f32.mxu0 0.0
  %344 = vmatmul.mubr.f32.gmra.mrb[0].mxu0 %v88
  %v345 = vpop.f32.mrb[0].mxu0
  %v346 = vadd.f32 0.0, %v345
  %v347 = vpop.f32.mrb[0].mxu0
  %348 = vmatprep.mubr.f32.mxu0 0.0
  %349 = vmatmul.mubr.f32.gmra.mrb[0].mxu0 %v91
  %v350 = vpop.f32.mrb[0].mxu0
  %v351 = vadd.f32 0.0, %v350
  %v352 = vpop.f32.mrb[0].mxu0
  %353 = vmatprep.mubr.f32.mxu0 0.0
  %354 = vmatmul.mubr.f32.gmra.mrb[0].mxu0 %v94
  %v355 = vpop.f32.mrb[0].mxu0
  %v356 = vadd.f32 0.0, %v355
  %v357 = vpop.f32.mrb[0].mxu0
  %358 = vmatprep.mubr.f32.mxu0 0.0
  %359 = vmatmul.mubr.f32.gmra.mrb[0].mxu0 %v97
  %v360 = vpop.f32.mrb[0].mxu0
  %v361 = vadd.f32 0.0, %v360
  %v362 = vpop.f32.mrb[0].mxu0
  %363 = vmatprep.mubr.f32.mxu0 0.0
  %364 = vmatmul.mubr.f32.gmra.mrb[0].mxu0 %v100
  %v365 = vpop.f32.mrb[0].mxu0
  %v366 = vadd.f32 0.0, %v365
  %v367 = vpop.f32.mrb[0].mxu0
  %368 = vmatprep.mubr.f32.mxu0 0.0
  %369 = vmatmul.mubr.f32.gmra.mrb[0].mxu0 %v103
  %v370 = vpop.f32.mrb[0].mxu0
  %v371 = vadd.f32 0.0, %v370
  %v372 = vpop.f32.mrb[0].mxu0
  %373 = vmatprep.mubr.f32.mxu0 0.0
  %374 = vmatmul.mubr.f32.gmra.mrb[0].mxu0 %v106
  %v375 = vpop.f32.mrb[0].mxu0
  %v376 = vadd.f32 0.0, %v375
  %v377 = vpop.f32.mrb[0].mxu0
  %378 = vmatprep.mubr.f32.mxu0 0.0
  %379 = vmatmul.mubr.f32.gmra.mrb[0].mxu0 %v109
  %v380 = vpop.f32.mrb[0].mxu0
  %v381 = vadd.f32 0.0, %v380
  %v382 = vpop.f32.mrb[0].mxu0
  %383 = vmatprep.mubr.f32.mxu0 0.0
  %384 = vmatmul.mubr.f32.gmra.mrb[0].mxu0 %v112
  %v385 = vpop.f32.mrb[0].mxu0
  %v386 = vadd.f32 0.0, %v385
  %v387 = vpop.f32.mrb[0].mxu0
  %388 = vmatprep.mubr.f32.mxu0 0.0
  %389 = vmatmul.mubr.f32.gmra.mrb[0].mxu0 %v115
  %v390 = vpop.f32.mrb[0].mxu0
  %v391 = vadd.f32 0.0, %v390
  %v392 = vpop.f32.mrb[0].mxu0
  %393 = vmatprep.mubr.f32.mxu0 0.0
  %394 = vmatmul.mubr.f32.gmra.mrb[0].mxu0 %v118
  %v395 = vpop.f32.mrb[0].mxu0
  %v396 = vadd.f32 0.0, %v395
  %v397 = vpop.f32.mrb[0].mxu0
  %398 = vmatprep.mubr.f32.mxu0 0.0
  %399 = vmatmul.mubr.f32.gmra.mrb[0].mxu0 %v121
  %v400 = vpop.f32.mrb[0].mxu0
  %v401 = vadd.f32 0.0, %v400
  %v402 = vpop.f32.mrb[0].mxu0
  %403 = vmatprep.mubr.f32.mxu0 0.0
  %404 = vmatmul.mubr.f32.gmra.mrb[0].mxu0 %v124
  %v405 = vpop.f32.mrb[0].mxu0
  %v406 = vadd.f32 0.0, %v405
  %v407 = vpop.f32.mrb[0].mxu0
  %408 = vmatprep.mubr.f32.mxu0 0.0
  %409 = vmatmul.mubr.f32.gmra.mrb[0].mxu0 %v127
  %v410 = vpop.f32.mrb[0].mxu0
  %v411 = vadd.f32 0.0, %v410
  %v412 = vpop.f32.mrb[0].mxu0
  %413 = vmatprep.mubr.f32.mxu0 0.0
  %414 = vmatmul.mubr.f32.gmra.mrb[0].mxu0 %v130
  %v415 = vpop.f32.mrb[0].mxu0
  %v416 = vadd.f32 0.0, %v415
  %v417 = vpop.f32.mrb[0].mxu0
  %418 = vmatprep.mubr.f32.mxu0 0.0
  %419 = vmatmul.mubr.f32.gmra.mrb[0].mxu0 %v133
  %v420 = vpop.f32.mrb[0].mxu0
  %v421 = vadd.f32 0.0, %v420
  %v422 = vpop.f32.mrb[0].mxu0
  %423 = vmatprep.mubr.f32.mxu0 0.0
  %424 = vmatmul.mubr.f32.gmra.mrb[0].mxu0 %v136
  %v425 = vpop.f32.mrb[0].mxu0
  %v426 = vadd.f32 0.0, %v425
  %v427 = vpop.f32.mrb[0].mxu0
  %428 = vmatprep.mubr.f32.mxu0 0.0
  %429 = vmatmul.mubr.f32.gmra.mrb[0].mxu0 %v139
  %v430 = vpop.f32.mrb[0].mxu0
  %v431 = vadd.f32 0.0, %v430
  %v432 = vpop.f32.mrb[0].mxu0
  %433 = vmatprep.mubr.f32.mxu0 0.0
  %434 = vmatmul.mubr.f32.gmra.mrb[0].mxu0 %v142
  %v435 = vpop.f32.mrb[0].mxu0
  %v436 = vadd.f32 0.0, %v435
  %v437 = vpop.f32.mrb[0].mxu0
  %438 = vmatprep.mubr.f32.mxu0 0.0
  %439 = vmatmul.mubr.f32.gmra.mrb[0].mxu0 %v145
  %v440 = vpop.f32.mrb[0].mxu0
  %v441 = vadd.f32 0.0, %v440
  %v442 = vpop.f32.mrb[0].mxu0
  %443 = vmatprep.mubr.f32.mxu0 0.0
  %444 = vmatmul.mubr.f32.gmra.mrb[0].mxu0 %v148
  %v445 = vpop.f32.mrb[0].mxu0
  %v446 = vadd.f32 0.0, %v445
  %v447 = vpop.f32.mrb[0].mxu0
  %448 = vmatprep.mubr.f32.mxu0 0.0
  %449 = vmatmul.mubr.f32.gmra.mrb[0].mxu0 %v151
  %v450 = vpop.f32.mrb[0].mxu0
  %v451 = vadd.f32 0.0, %v450
  %v452 = vpop.f32.mrb[0].mxu0
  %453 = vmatprep.mubr.f32.mxu0 0.0
  %454 = vmatmul.mubr.f32.gmra.mrb[0].mxu0 %v154
  %v455 = vpop.f32.mrb[0].mxu0
  %v456 = vadd.f32 0.0, %v455
  %v457 = vpop.f32.mrb[0].mxu0
  %458 = vmatprep.mubr.f32.mxu0 0.0
  %459 = vmatmul.mubr.f32.gmra.mrb[0].mxu0 %v157
  %v460 = vpop.f32.mrb[0].mxu0
  %v461 = vadd.f32 0.0, %v460
  %v462 = vpop.f32.mrb[0].mxu0
  %463 = vmatprep.mubr.f32.mxu0 0.0
  %464 = vmatmul.mubr.f32.gmra.mrb[0].mxu0 %v160
  %v465 = vpop.f32.mrb[0].mxu0
  %v466 = vadd.f32 0.0, %v465
  %v467 = vpop.f32.mrb[0].mxu0
  %468 = vmatprep.mubr.f32.mxu0 0.0
  %469 = vmatmul.mubr.f32.gmra.mrb[0].mxu0 %v163
  %v470 = vpop.f32.mrb[0].mxu0
  %v471 = vadd.f32 0.0, %v470
  %v472 = vpop.f32.mrb[0].mxu0
  %473 = vmatprep.mubr.f32.mxu0 0.0
  %474 = vmatmul.mubr.f32.gmra.mrb[0].mxu0 %v166
  %v475 = vpop.f32.mrb[0].mxu0
  %v476 = vadd.f32 0.0, %v475
  %v477 = vpop.f32.mrb[0].mxu0
  %478 = vmatprep.mubr.f32.mxu0 0.0
  %479 = vmatmul.mubr.f32.gmra.mrb[0].mxu0 %v169
  %v480 = vpop.f32.mrb[0].mxu0
  %v481 = vadd.f32 0.0, %v480
  %v482 = vpop.f32.mrb[0].mxu0
  %483 = vmatprep.mubr.f32.mxu0 0.0
  %484 = vmatmul.mubr.f32.gmra.mrb[0].mxu0 %v172
  %v485 = vpop.f32.mrb[0].mxu0
  %v486 = vadd.f32 0.0, %v485
  %v487 = vpop.f32.mrb[0].mxu0
  %488 = vmatprep.mubr.f32.mxu0 0.0
  %489 = vmatmul.mubr.f32.gmra.mrb[0].mxu0 %v175
  %v490 = vpop.f32.mrb[0].mxu0
  %v491 = vadd.f32 0.0, %v490
  %v492 = vpop.f32.mrb[0].mxu0
  %493 = vmatprep.mubr.f32.mxu0 0.0
  %494 = vmatmul.mubr.f32.gmra.mrb[0].mxu0 %v178
  %v495 = vpop.f32.mrb[0].mxu0
  %v496 = vadd.f32 0.0, %v495
  %v497 = vpop.f32.mrb[0].mxu0
  %498 = vmatprep.mubr.f32.mxu0 0.0
  %499 = vmatmul.mubr.f32.gmra.mrb[0].mxu0 %v181
  %v500 = vpop.f32.mrb[0].mxu0
  %v501 = vadd.f32 0.0, %v500
  %v502 = vpop.f32.mrb[0].mxu0
  %503 = vmatprep.mubr.f32.mxu0 0.0
  %504 = vmatmul.mubr.f32.gmra.mrb[0].mxu0 %v184
  %v505 = vpop.f32.mrb[0].mxu0
  %v506 = vadd.f32 0.0, %v505
  %v507 = vpop.f32.mrb[0].mxu0
  %508 = vmatprep.mubr.f32.mxu0 0.0
  %509 = vmatmul.mubr.f32.gmra.mrb[0].mxu0 %v187
  %v510 = vpop.f32.mrb[0].mxu0
  %v511 = vadd.f32 0.0, %v510
  %v512 = vpop.f32.mrb[0].mxu0
  %513 = vmatprep.mubr.f32.mxu0 0.0
  %514 = vmatmul.mubr.f32.gmra.mrb[0].mxu0 %v190
  %v515 = vpop.f32.mrb[0].mxu0
  %v516 = vadd.f32 0.0, %v515
  %v517 = vpop.f32.mrb[0].mxu0
  %518 = vmatprep.mubr.f32.mxu0 0.0
  %519 = vmatmul.mubr.f32.gmra.mrb[0].mxu0 %v193
  %v520 = vpop.f32.mrb[0].mxu0
  %v521 = vadd.f32 0.0, %v520
  %v522 = vpop.f32.mrb[0].mxu0
  %523 = vmatprep.mubr.f32.mxu0 0.0
  %524 = vmatmul.mubr.f32.gmra.mrb[0].mxu0 %v196
  %v525 = vpop.f32.mrb[0].mxu0
  %v526 = vadd.f32 0.0, %v525
  %v527 = vpop.f32.mrb[0].mxu0
  %528 = vmatprep.mubr.f32.mxu0 0.0
  %529 = vmatmul.mubr.f32.gmra.mrb[0].mxu0 %v199
  %v530 = vpop.f32.mrb[0].mxu0
  %v531 = vadd.f32 0.0, %v530
  %v532 = vpop.f32.mrb[0].mxu0
  %533 = vmatprep.mubr.f32.mxu0 0.0
  %534 = vmatmul.mubr.f32.gmra.mrb[0].mxu0 %v202
  %v535 = vpop.f32.mrb[0].mxu0
  %v536 = vadd.f32 0.0, %v535
  %v537 = vpop.f32.mrb[0].mxu0
  %538 = vmatprep.mubr.f32.mxu0 0.0
  %539 = vmatmul.mubr.f32.gmra.mrb[0].mxu0 %v205
  %v540 = vpop.f32.mrb[0].mxu0
  %v541 = vadd.f32 0.0, %v540
  %v542 = vpop.f32.mrb[0].mxu0
  %543 = vmatprep.mubr.f32.mxu0 0.0
  %544 = vmatmul.mubr.f32.gmra.mrb[0].mxu0 %v208
  %v545 = vpop.f32.mrb[0].mxu0
  %v546 = vadd.f32 0.0, %v545
  %v547 = vpop.f32.mrb[0].mxu0
  %548 = vmatprep.mubr.f32.mxu0 0.0
  %549 = vmatmul.mubr.f32.gmra.mrb[0].mxu0 %v211
  %v550 = vpop.f32.mrb[0].mxu0
  %v551 = vadd.f32 0.0, %v550
  %v552 = vpop.f32.mrb[0].mxu0
  %553 = vmatprep.mubr.f32.mxu0 0.0
  %554 = vmatmul.mubr.f32.gmra.mrb[0].mxu0 %v214
  %v555 = vpop.f32.mrb[0].mxu0
  %v556 = vadd.f32 0.0, %v555
  %v557 = vpop.f32.mrb[0].mxu0
  %558 = vmatprep.mubr.f32.mxu0 0.0
  %559 = vmatmul.mubr.f32.gmra.mrb[0].mxu0 %v217
  %v560 = vpop.f32.mrb[0].mxu0
  %v561 = vadd.f32 0.0, %v560
  %v562 = vpop.f32.mrb[0].mxu0
  %563 = vmatprep.mubr.f32.mxu0 0.0
  %564 = vmatmul.mubr.f32.gmra.mrb[0].mxu0 %v220
  %v565 = vpop.f32.mrb[0].mxu0
  %v566 = vadd.f32 0.0, %v565
  %v567 = vpop.f32.mrb[0].mxu0
  %568 = vmatprep.mubr.f32.mxu0 0.0
  %569 = vmatmul.mubr.f32.gmra.mrb[0].mxu0 %v223
  %v570 = vpop.f32.mrb[0].mxu0
  %v571 = vadd.f32 0.0, %v570
  %v572 = vpop.f32.mrb[0].mxu0
  %573 = vmatprep.mubr.f32.mxu0 0.0
  %574 = vmatmul.mubr.f32.gmra.mrb[0].mxu0 %v226
  %v575 = vpop.f32.mrb[0].mxu0
  %v576 = vadd.f32 0.0, %v575
  %v577 = vpop.f32.mrb[0].mxu0
  %578 = vmatprep.mubr.f32.mxu0 0.0
  %579 = vmatmul.mubr.f32.gmra.mrb[0].mxu0 %v229
  %v580 = vpop.f32.mrb[0].mxu0
  %v581 = vadd.f32 0.0, %v580
  %v582 = vpop.f32.mrb[0].mxu0
  %583 = vmatprep.mubr.f32.mxu0 0.0
  %584 = vmatmul.mubr.f32.gmra.mrb[0].mxu0 %v232
  %v585 = vpop.f32.mrb[0].mxu0
  %v586 = vadd.f32 0.0, %v585
  %v587 = vpop.f32.mrb[0].mxu0
  %588 = vmatprep.mubr.f32.mxu0 0.0
  %589 = vmatmul.mubr.f32.gmra.mrb[0].mxu0 %v235
  %v590 = vpop.f32.mrb[0].mxu0
  %v591 = vadd.f32 0.0, %v590
  %v592 = vpop.f32.mrb[0].mxu0
  %593 = vmatprep.mubr.f32.mxu0 0.0
  %594 = vmatmul.mubr.f32.gmra.mrb[0].mxu0 %v238
  %v595 = vpop.f32.mrb[0].mxu0
  %v596 = vadd.f32 0.0, %v595
  %v597 = vpop.f32.mrb[0].mxu0
  %598 = vmatprep.mubr.f32.mxu0 0.0
  %599 = vmatmul.mubr.f32.gmra.mrb[0].mxu0 %v241
  %v600 = vpop.f32.mrb[0].mxu0
  %v601 = vadd.f32 0.0, %v600
  %v602 = vpop.f32.mrb[0].mxu0
  %603 = vmatprep.mubr.f32.mxu0 0.0
  %604 = vmatmul.mubr.f32.gmra.mrb[0].mxu0 %v244
  %v605 = vpop.f32.mrb[0].mxu0
  %v606 = vadd.f32 0.0, %v605
  %v607 = vpop.f32.mrb[0].mxu0
  %608 = vmatprep.mubr.f32.mxu0 0.0
  %609 = vmatmul.mubr.f32.gmra.mrb[0].mxu0 %v247
  %v610 = vpop.f32.mrb[0].mxu0
  %v611 = vadd.f32 0.0, %v610
  %v612 = vpop.f32.mrb[0].mxu0
  %613 = vmatprep.mubr.f32.mxu0 0.0
  %614 = vmatmul.mubr.f32.gmra.mrb[0].mxu0 %v250
  %v615 = vpop.f32.mrb[0].mxu0
  %v616 = vadd.f32 0.0, %v615
  %v617 = vpop.f32.mrb[0].mxu0
  %618 = vmatprep.mubr.f32.mxu0 0.0
  %619 = vmatmul.mubr.f32.gmra.mrb[0].mxu0 %v253
  %v620 = vpop.f32.mrb[0].mxu0
  %v621 = vadd.f32 0.0, %v620
  %v622 = vpop.f32.mrb[0].mxu0
  %623 = vmatprep.mubr.f32.mxu0 0.0
  %624 = vmatmul.mubr.f32.gmra.mrb[0].mxu0 %v256
  %v625 = vpop.f32.mrb[0].mxu0
  %v626 = vadd.f32 0.0, %v625
  %v627 = vpop.f32.mrb[0].mxu0
  %628 = vmatprep.mubr.f32.mxu0 0.0
  %629 = vmatmul.mubr.f32.gmra.mrb[0].mxu0 %v259
  %v630 = vpop.f32.mrb[0].mxu0
  %v631 = vadd.f32 0.0, %v630
  %v632 = vpop.f32.mrb[0].mxu0
  %633 = vmatprep.mubr.f32.mxu0 0.0
  %634 = vmatmul.mubr.f32.gmra.mrb[0].mxu0 %v262
  %v635 = vpop.f32.mrb[0].mxu0
  %v636 = vadd.f32 0.0, %v635
  %v637 = vpop.f32.mrb[0].mxu0
  %638 = vmatprep.mubr.f32.mxu0 0.0
  %639 = vmatmul.mubr.f32.gmra.mrb[0].mxu0 %v265
  %v640 = vpop.f32.mrb[0].mxu0
  %v641 = vadd.f32 0.0, %v640
  %v642 = vpop.f32.mrb[0].mxu0
  %643 = vmatprep.mubr.f32.mxu0 0.0
  %644 = vmatmul.mubr.f32.gmra.mrb[0].mxu0 %v268
  %v645 = vpop.f32.mrb[0].mxu0
  %v646 = vadd.f32 0.0, %v645
  %v647 = vpop.f32.mrb[0].mxu0
  %648 = vmatprep.mubr.f32.mxu0 0.0
  %649 = vmatmul.mubr.f32.gmra.mrb[0].mxu0 %v271
  %v650 = vpop.f32.mrb[0].mxu0
  %v651 = vadd.f32 0.0, %v650
  %v652 = vpop.f32.mrb[0].mxu0
  %653 = vmatprep.mubr.f32.mxu0 0.0
  %654 = vmatmul.mubr.f32.gmra.mrb[0].mxu0 %v274
  %v655 = vpop.f32.mrb[0].mxu0
  %v656 = vadd.f32 0.0, %v655
  %v657 = vpop.f32.mrb[0].mxu0
  %658 = vmatprep.mubr.f32.mxu0 0.0
  %659 = vmatmul.mubr.f32.gmra.mrb[0].mxu0 %v277
  %v660 = vpop.f32.mrb[0].mxu0
  %v661 = vadd.f32 0.0, %v660
  %v662 = vpop.f32.mrb[0].mxu0
  %663 = vdwg.mxu0
  %v664 = vld [vmem:[%s2] sm:$0x1]
  %v666 = vlaneseq
  %v667 = vshrl.u32 %v666, 7
  %v668 = vsub.s32 0, %v667
  %v669 = vrot.slane %v664, %v668
  %v671 = vmul.f32 %v346, %v669
  %v672 = vmul.f32 %v351, %v669
  %v673 = vmul.f32 %v356, %v669
  %v674 = vmul.f32 %v361, %v669
  %v675 = vmul.f32 %v366, %v669
  %v676 = vmul.f32 %v371, %v669
  %v677 = vmul.f32 %v376, %v669
  %v678 = vmul.f32 %v381, %v669
  %v679 = vmul.f32 %v386, %v669
  %v680 = vmul.f32 %v391, %v669
  %v681 = vmul.f32 %v396, %v669
  %v682 = vmul.f32 %v401, %v669
  %v683 = vmul.f32 %v406, %v669
  %v684 = vmul.f32 %v411, %v669
  %v685 = vmul.f32 %v416, %v669
  %v686 = vmul.f32 %v421, %v669
  %v687 = vmul.f32 %v426, %v669
  %v688 = vmul.f32 %v431, %v669
  %v689 = vmul.f32 %v436, %v669
  %v690 = vmul.f32 %v441, %v669
  %v691 = vmul.f32 %v446, %v669
  %v692 = vmul.f32 %v451, %v669
  %v693 = vmul.f32 %v456, %v669
  %v694 = vmul.f32 %v461, %v669
  %v695 = vmul.f32 %v466, %v669
  %v696 = vmul.f32 %v471, %v669
  %v697 = vmul.f32 %v476, %v669
  %v698 = vmul.f32 %v481, %v669
  %v699 = vmul.f32 %v486, %v669
  %v700 = vmul.f32 %v491, %v669
  %v701 = vmul.f32 %v496, %v669
  %v702 = vmul.f32 %v501, %v669
  %v703 = vmul.f32 %v506, %v669
  %v704 = vmul.f32 %v511, %v669
  %v705 = vmul.f32 %v516, %v669
  %v706 = vmul.f32 %v521, %v669
  %v707 = vmul.f32 %v526, %v669
  %v708 = vmul.f32 %v531, %v669
  %v709 = vmul.f32 %v536, %v669
  %v710 = vmul.f32 %v541, %v669
  %v711 = vmul.f32 %v546, %v669
  %v712 = vmul.f32 %v551, %v669
  %v713 = vmul.f32 %v556, %v669
  %v714 = vmul.f32 %v561, %v669
  %v715 = vmul.f32 %v566, %v669
  %v716 = vmul.f32 %v571, %v669
  %v717 = vmul.f32 %v576, %v669
  %v718 = vmul.f32 %v581, %v669
  %v719 = vmul.f32 %v586, %v669
  %v720 = vmul.f32 %v591, %v669
  %v721 = vmul.f32 %v596, %v669
  %v722 = vmul.f32 %v601, %v669
  %v723 = vmul.f32 %v606, %v669
  %v724 = vmul.f32 %v611, %v669
  %v725 = vmul.f32 %v616, %v669
  %v726 = vmul.f32 %v621, %v669
  %v727 = vmul.f32 %v626, %v669
  %v728 = vmul.f32 %v631, %v669
  %v729 = vmul.f32 %v636, %v669
  %v730 = vmul.f32 %v641, %v669
  %v731 = vmul.f32 %v646, %v669
  %v732 = vmul.f32 %v651, %v669
  %v733 = vmul.f32 %v656, %v669
  %v734 = vmul.f32 %v661, %v669
  %v735 = vld [vmem:[%s3] sm:$0x1]
  %v737 = vlaneseq
  %v738 = vshrl.u32 %v737, 7
  %v739 = vsub.s32 0, %v738
  %v740 = vrot.slane %v735, %v739
  %v742 = vadd.f32 %v671, %v740
  %v743 = vadd.f32 %v672, %v740
  %v744 = vadd.f32 %v673, %v740
  %v745 = vadd.f32 %v674, %v740
  %v746 = vadd.f32 %v675, %v740
  %v747 = vadd.f32 %v676, %v740
  %v748 = vadd.f32 %v677, %v740
  %v749 = vadd.f32 %v678, %v740
  %v750 = vadd.f32 %v679, %v740
  %v751 = vadd.f32 %v680, %v740
  %v752 = vadd.f32 %v681, %v740
  %v753 = vadd.f32 %v682, %v740
  %v754 = vadd.f32 %v683, %v740
  %v755 = vadd.f32 %v684, %v740
  %v756 = vadd.f32 %v685, %v740
  %v757 = vadd.f32 %v686, %v740
  %v758 = vadd.f32 %v687, %v740
  %v759 = vadd.f32 %v688, %v740
  %v760 = vadd.f32 %v689, %v740
  %v761 = vadd.f32 %v690, %v740
  %v762 = vadd.f32 %v691, %v740
  %v763 = vadd.f32 %v692, %v740
  %v764 = vadd.f32 %v693, %v740
  %v765 = vadd.f32 %v694, %v740
  %v766 = vadd.f32 %v695, %v740
  %v767 = vadd.f32 %v696, %v740
  %v768 = vadd.f32 %v697, %v740
  %v769 = vadd.f32 %v698, %v740
  %v770 = vadd.f32 %v699, %v740
  %v771 = vadd.f32 %v700, %v740
  %v772 = vadd.f32 %v701, %v740
  %v773 = vadd.f32 %v702, %v740
  %v774 = vadd.f32 %v703, %v740
  %v775 = vadd.f32 %v704, %v740
  %v776 = vadd.f32 %v705, %v740
  %v777 = vadd.f32 %v706, %v740
  %v778 = vadd.f32 %v707, %v740
  %v779 = vadd.f32 %v708, %v740
  %v780 = vadd.f32 %v709, %v740
  %v781 = vadd.f32 %v710, %v740
  %v782 = vadd.f32 %v711, %v740
  %v783 = vadd.f32 %v712, %v740
  %v784 = vadd.f32 %v713, %v740
  %v785 = vadd.f32 %v714, %v740
  %v786 = vadd.f32 %v715, %v740
  %v787 = vadd.f32 %v716, %v740
  %v788 = vadd.f32 %v717, %v740
  %v789 = vadd.f32 %v718, %v740
  %v790 = vadd.f32 %v719, %v740
  %v791 = vadd.f32 %v720, %v740
  %v792 = vadd.f32 %v721, %v740
  %v793 = vadd.f32 %v722, %v740
  %v794 = vadd.f32 %v723, %v740
  %v795 = vadd.f32 %v724, %v740
  %v796 = vadd.f32 %v725, %v740
  %v797 = vadd.f32 %v726, %v740
  %v798 = vadd.f32 %v727, %v740
  %v799 = vadd.f32 %v728, %v740
  %v800 = vadd.f32 %v729, %v740
  %v801 = vadd.f32 %v730, %v740
  %v802 = vadd.f32 %v731, %v740
  %v803 = vadd.f32 %v732, %v740
  %v804 = vadd.f32 %v733, %v740
  %v805 = vadd.f32 %v734, %v740
  %vm806 = vcmp.ge.f32.partialorder %v742, 0.0
  %vm807 = vcmp.ge.f32.partialorder %v743, 0.0
  %vm808 = vcmp.ge.f32.partialorder %v744, 0.0
  %vm809 = vcmp.ge.f32.partialorder %v745, 0.0
  %vm810 = vcmp.ge.f32.partialorder %v746, 0.0
  %vm811 = vcmp.ge.f32.partialorder %v747, 0.0
  %vm812 = vcmp.ge.f32.partialorder %v748, 0.0
  %vm813 = vcmp.ge.f32.partialorder %v749, 0.0
  %vm814 = vcmp.ge.f32.partialorder %v750, 0.0
  %vm815 = vcmp.ge.f32.partialorder %v751, 0.0
  %vm816 = vcmp.ge.f32.partialorder %v752, 0.0
  %vm817 = vcmp.ge.f32.partialorder %v753, 0.0
  %vm818 = vcmp.ge.f32.partialorder %v754, 0.0
  %vm819 = vcmp.ge.f32.partialorder %v755, 0.0
  %vm820 = vcmp.ge.f32.partialorder %v756, 0.0
  %vm821 = vcmp.ge.f32.partialorder %v757, 0.0
  %vm822 = vcmp.ge.f32.partialorder %v758, 0.0
  %vm823 = vcmp.ge.f32.partialorder %v759, 0.0
  %vm824 = vcmp.ge.f32.partialorder %v760, 0.0
  %vm825 = vcmp.ge.f32.partialorder %v761, 0.0
  %vm826 = vcmp.ge.f32.partialorder %v762, 0.0
  %vm827 = vcmp.ge.f32.partialorder %v763, 0.0
  %vm828 = vcmp.ge.f32.partialorder %v764, 0.0
  %vm829 = vcmp.ge.f32.partialorder %v765, 0.0
  %vm830 = vcmp.ge.f32.partialorder %v766, 0.0
  %vm831 = vcmp.ge.f32.partialorder %v767, 0.0
  %vm832 = vcmp.ge.f32.partialorder %v768, 0.0
  %vm833 = vcmp.ge.f32.partialorder %v769, 0.0
  %vm834 = vcmp.ge.f32.partialorder %v770, 0.0
  %vm835 = vcmp.ge.f32.partialorder %v771, 0.0
  %vm836 = vcmp.ge.f32.partialorder %v772, 0.0
  %vm837 = vcmp.ge.f32.partialorder %v773, 0.0
  %vm838 = vcmp.ge.f32.partialorder %v774, 0.0
  %vm839 = vcmp.ge.f32.partialorder %v775, 0.0
  %vm840 = vcmp.ge.f32.partialorder %v776, 0.0
  %vm841 = vcmp.ge.f32.partialorder %v777, 0.0
  %vm842 = vcmp.ge.f32.partialorder %v778, 0.0
  %vm843 = vcmp.ge.f32.partialorder %v779, 0.0
  %vm844 = vcmp.ge.f32.partialorder %v780, 0.0
  %vm845 = vcmp.ge.f32.partialorder %v781, 0.0
  %vm846 = vcmp.ge.f32.partialorder %v782, 0.0
  %vm847 = vcmp.ge.f32.partialorder %v783, 0.0
  %vm848 = vcmp.ge.f32.partialorder %v784, 0.0
  %vm849 = vcmp.ge.f32.partialorder %v785, 0.0
  %vm850 = vcmp.ge.f32.partialorder %v786, 0.0
  %vm851 = vcmp.ge.f32.partialorder %v787, 0.0
  %vm852 = vcmp.ge.f32.partialorder %v788, 0.0
  %vm853 = vcmp.ge.f32.partialorder %v789, 0.0
  %vm854 = vcmp.ge.f32.partialorder %v790, 0.0
  %vm855 = vcmp.ge.f32.partialorder %v791, 0.0
  %vm856 = vcmp.ge.f32.partialorder %v792, 0.0
  %vm857 = vcmp.ge.f32.partialorder %v793, 0.0
  %vm858 = vcmp.ge.f32.partialorder %v794, 0.0
  %vm859 = vcmp.ge.f32.partialorder %v795, 0.0
  %vm860 = vcmp.ge.f32.partialorder %v796, 0.0
  %vm861 = vcmp.ge.f32.partialorder %v797, 0.0
  %vm862 = vcmp.ge.f32.partialorder %v798, 0.0
  %vm863 = vcmp.ge.f32.partialorder %v799, 0.0
  %vm864 = vcmp.ge.f32.partialorder %v800, 0.0
  %vm865 = vcmp.ge.f32.partialorder %v801, 0.0
  %vm866 = vcmp.ge.f32.partialorder %v802, 0.0
  %vm867 = vcmp.ge.f32.partialorder %v803, 0.0
  %vm868 = vcmp.ge.f32.partialorder %v804, 0.0
  %vm869 = vcmp.ge.f32.partialorder %v805, 0.0
  %v870 = vmul.f32 %v742, 0.01
  %v871 = vmul.f32 %v743, 0.01
  %v872 = vmul.f32 %v744, 0.01
  %v873 = vmul.f32 %v745, 0.01
  %v874 = vmul.f32 %v746, 0.01
  %v875 = vmul.f32 %v747, 0.01
  %v876 = vmul.f32 %v748, 0.01
  %v877 = vmul.f32 %v749, 0.01
  %v878 = vmul.f32 %v750, 0.01
  %v879 = vmul.f32 %v751, 0.01
  %v880 = vmul.f32 %v752, 0.01
  %v881 = vmul.f32 %v753, 0.01
  %v882 = vmul.f32 %v754, 0.01
  %v883 = vmul.f32 %v755, 0.01
  %v884 = vmul.f32 %v756, 0.01
  %v885 = vmul.f32 %v757, 0.01
  %v886 = vmul.f32 %v758, 0.01
  %v887 = vmul.f32 %v759, 0.01
  %v888 = vmul.f32 %v760, 0.01
  %v889 = vmul.f32 %v761, 0.01
  %v890 = vmul.f32 %v762, 0.01
  %v891 = vmul.f32 %v763, 0.01
  %v892 = vmul.f32 %v764, 0.01
  %v893 = vmul.f32 %v765, 0.01
  %v894 = vmul.f32 %v766, 0.01
  %v895 = vmul.f32 %v767, 0.01
  %v896 = vmul.f32 %v768, 0.01
  %v897 = vmul.f32 %v769, 0.01
  %v898 = vmul.f32 %v770, 0.01
  %v899 = vmul.f32 %v771, 0.01
  %v900 = vmul.f32 %v772, 0.01
  %v901 = vmul.f32 %v773, 0.01
  %v902 = vmul.f32 %v774, 0.01
  %v903 = vmul.f32 %v775, 0.01
  %v904 = vmul.f32 %v776, 0.01
  %v905 = vmul.f32 %v777, 0.01
  %v906 = vmul.f32 %v778, 0.01
  %v907 = vmul.f32 %v779, 0.01
  %v908 = vmul.f32 %v780, 0.01
  %v909 = vmul.f32 %v781, 0.01
  %v910 = vmul.f32 %v782, 0.01
  %v911 = vmul.f32 %v783, 0.01
  %v912 = vmul.f32 %v784, 0.01
  %v913 = vmul.f32 %v785, 0.01
  %v914 = vmul.f32 %v786, 0.01
  %v915 = vmul.f32 %v787, 0.01
  %v916 = vmul.f32 %v788, 0.01
  %v917 = vmul.f32 %v789, 0.01
  %v918 = vmul.f32 %v790, 0.01
  %v919 = vmul.f32 %v791, 0.01
  %v920 = vmul.f32 %v792, 0.01
  %v921 = vmul.f32 %v793, 0.01
  %v922 = vmul.f32 %v794, 0.01
  %v923 = vmul.f32 %v795, 0.01
  %v924 = vmul.f32 %v796, 0.01
  %v925 = vmul.f32 %v797, 0.01
  %v926 = vmul.f32 %v798, 0.01
  %v927 = vmul.f32 %v799, 0.01
  %v928 = vmul.f32 %v800, 0.01
  %v929 = vmul.f32 %v801, 0.01
  %v930 = vmul.f32 %v802, 0.01
  %v931 = vmul.f32 %v803, 0.01
  %v932 = vmul.f32 %v804, 0.01
  %v933 = vmul.f32 %v805, 0.01
  %v934 = vsel %vm806, %v742, %v870
  %v935 = vsel %vm807, %v743, %v871
  %v936 = vsel %vm808, %v744, %v872
  %v937 = vsel %vm809, %v745, %v873
  %v938 = vsel %vm810, %v746, %v874
  %v939 = vsel %vm811, %v747, %v875
  %v940 = vsel %vm812, %v748, %v876
  %v941 = vsel %vm813, %v749, %v877
  %v942 = vsel %vm814, %v750, %v878
  %v943 = vsel %vm815, %v751, %v879
  %v944 = vsel %vm816, %v752, %v880
  %v945 = vsel %vm817, %v753, %v881
  %v946 = vsel %vm818, %v754, %v882
  %v947 = vsel %vm819, %v755, %v883
  %v948 = vsel %vm820, %v756, %v884
  %v949 = vsel %vm821, %v757, %v885
  %v950 = vsel %vm822, %v758, %v886
  %v951 = vsel %vm823, %v759, %v887
  %v952 = vsel %vm824, %v760, %v888
  %v953 = vsel %vm825, %v761, %v889
  %v954 = vsel %vm826, %v762, %v890
  %v955 = vsel %vm827, %v763, %v891
  %v956 = vsel %vm828, %v764, %v892
  %v957 = vsel %vm829, %v765, %v893
  %v958 = vsel %vm830, %v766, %v894
  %v959 = vsel %vm831, %v767, %v895
  %v960 = vsel %vm832, %v768, %v896
  %v961 = vsel %vm833, %v769, %v897
  %v962 = vsel %vm834, %v770, %v898
  %v963 = vsel %vm835, %v771, %v899
  %v964 = vsel %vm836, %v772, %v900
  %v965 = vsel %vm837, %v773, %v901
  %v966 = vsel %vm838, %v774, %v902
  %v967 = vsel %vm839, %v775, %v903
  %v968 = vsel %vm840, %v776, %v904
  %v969 = vsel %vm841, %v777, %v905
  %v970 = vsel %vm842, %v778, %v906
  %v971 = vsel %vm843, %v779, %v907
  %v972 = vsel %vm844, %v780, %v908
  %v973 = vsel %vm845, %v781, %v909
  %v974 = vsel %vm846, %v782, %v910
  %v975 = vsel %vm847, %v783, %v911
  %v976 = vsel %vm848, %v784, %v912
  %v977 = vsel %vm849, %v785, %v913
  %v978 = vsel %vm850, %v786, %v914
  %v979 = vsel %vm851, %v787, %v915
  %v980 = vsel %vm852, %v788, %v916
  %v981 = vsel %vm853, %v789, %v917
  %v982 = vsel %vm854, %v790, %v918
  %v983 = vsel %vm855, %v791, %v919
  %v984 = vsel %vm856, %v792, %v920
  %v985 = vsel %vm857, %v793, %v921
  %v986 = vsel %vm858, %v794, %v922
  %v987 = vsel %vm859, %v795, %v923
  %v988 = vsel %vm860, %v796, %v924
  %v989 = vsel %vm861, %v797, %v925
  %v990 = vsel %vm862, %v798, %v926
  %v991 = vsel %vm863, %v799, %v927
  %v992 = vsel %vm864, %v800, %v928
  %v993 = vsel %vm865, %v801, %v929
  %v994 = vsel %vm866, %v802, %v930
  %v995 = vsel %vm867, %v803, %v931
  %v996 = vsel %vm868, %v804, %v932
  %v997 = vsel %vm869, %v805, %v933
  %998 = vst [vmem:[%s4] sm:$0xff] %v934
  %999 = vst [vmem:[%s4 + $0x8] sm:$0xff] %v935
  %1000 = vst [vmem:[%s4 + $0x10] sm:$0xff] %v936
  %1001 = vst [vmem:[%s4 + $0x18] sm:$0xff] %v937
  %1002 = vst [vmem:[%s4 + $0x20] sm:$0xff] %v938
  %1003 = vst [vmem:[%s4 + $0x28] sm:$0xff] %v939
  %1004 = vst [vmem:[%s4 + $0x30] sm:$0xff] %v940
  %1005 = vst [vmem:[%s4 + $0x38] sm:$0xff] %v941
  %1006 = vst [vmem:[%s4 + $0x40] sm:$0xff] %v942
  %1007 = vst [vmem:[%s4 + $0x48] sm:$0xff] %v943
  %1008 = vst [vmem:[%s4 + $0x50] sm:$0xff] %v944
  %1009 = vst [vmem:[%s4 + $0x58] sm:$0xff] %v945
  %1010 = vst [vmem:[%s4 + $0x60] sm:$0xff] %v946
  %1011 = vst [vmem:[%s4 + $0x68] sm:$0xff] %v947
  %1012 = vst [vmem:[%s4 + $0x70] sm:$0xff] %v948
  %1013 = vst [vmem:[%s4 + $0x78] sm:$0xff] %v949
  %1014 = vst [vmem:[%s4 + $0x80] sm:$0xff] %v950
  %1015 = vst [vmem:[%s4 + $0x88] sm:$0xff] %v951
  %1016 = vst [vmem:[%s4 + $0x90] sm:$0xff] %v952
  %1017 = vst [vmem:[%s4 + $0x98] sm:$0xff] %v953
  %1018 = vst [vmem:[%s4 + $0xa0] sm:$0xff] %v954
  %1019 = vst [vmem:[%s4 + $0xa8] sm:$0xff] %v955
  %1020 = vst [vmem:[%s4 + $0xb0] sm:$0xff] %v956
  %1021 = vst [vmem:[%s4 + $0xb8] sm:$0xff] %v957
  %1022 = vst [vmem:[%s4 + $0xc0] sm:$0xff] %v958
  %1023 = vst [vmem:[%s4 + $0xc8] sm:$0xff] %v959
  %1024 = vst [vmem:[%s4 + $0xd0] sm:$0xff] %v960
  %1025 = vst [vmem:[%s4 + $0xd8] sm:$0xff] %v961
  %1026 = vst [vmem:[%s4 + $0xe0] sm:$0xff] %v962
  %1027 = vst [vmem:[%s4 + $0xe8] sm:$0xff] %v963
  %1028 = vst [vmem:[%s4 + $0xf0] sm:$0xff] %v964
  %1029 = vst [vmem:[%s4 + $0xf8] sm:$0xff] %v965
  %1030 = vst [vmem:[%s4 + $0x100] sm:$0xff] %v966
  %1031 = vst [vmem:[%s4 + $0x108] sm:$0xff] %v967
  %1032 = vst [vmem:[%s4 + $0x110] sm:$0xff] %v968
  %1033 = vst [vmem:[%s4 + $0x118] sm:$0xff] %v969
  %1034 = vst [vmem:[%s4 + $0x120] sm:$0xff] %v970
  %1035 = vst [vmem:[%s4 + $0x128] sm:$0xff] %v971
  %1036 = vst [vmem:[%s4 + $0x130] sm:$0xff] %v972
  %1037 = vst [vmem:[%s4 + $0x138] sm:$0xff] %v973
  %1038 = vst [vmem:[%s4 + $0x140] sm:$0xff] %v974
  %1039 = vst [vmem:[%s4 + $0x148] sm:$0xff] %v975
  %1040 = vst [vmem:[%s4 + $0x150] sm:$0xff] %v976
  %1041 = vst [vmem:[%s4 + $0x158] sm:$0xff] %v977
  %1042 = vst [vmem:[%s4 + $0x160] sm:$0xff] %v978
  %1043 = vst [vmem:[%s4 + $0x168] sm:$0xff] %v979
  %1044 = vst [vmem:[%s4 + $0x170] sm:$0xff] %v980
  %1045 = vst [vmem:[%s4 + $0x178] sm:$0xff] %v981
  %1046 = vst [vmem:[%s4 + $0x180] sm:$0xff] %v982
  %1047 = vst [vmem:[%s4 + $0x188] sm:$0xff] %v983
  %1048 = vst [vmem:[%s4 + $0x190] sm:$0xff] %v984
  %1049 = vst [vmem:[%s4 + $0x198] sm:$0xff] %v985
  %1050 = vst [vmem:[%s4 + $0x1a0] sm:$0xff] %v986
  %1051 = vst [vmem:[%s4 + $0x1a8] sm:$0xff] %v987
  %1052 = vst [vmem:[%s4 + $0x1b0] sm:$0xff] %v988
  %1053 = vst [vmem:[%s4 + $0x1b8] sm:$0xff] %v989
  %1054 = vst [vmem:[%s4 + $0x1c0] sm:$0xff] %v990
  %1055 = vst [vmem:[%s4 + $0x1c8] sm:$0xff] %v991
  %1056 = vst [vmem:[%s4 + $0x1d0] sm:$0xff] %v992
  %1057 = vst [vmem:[%s4 + $0x1d8] sm:$0xff] %v993
  %1058 = vst [vmem:[%s4 + $0x1e0] sm:$0xff] %v994
  %1059 = vst [vmem:[%s4 + $0x1e8] sm:$0xff] %v995
  %1060 = vst [vmem:[%s4 + $0x1f0] sm:$0xff] %v996
  %1061 = vst [vmem:[%s4 + $0x1f8] sm:$0xff] %v997
  // Predicated region
  $region18: #{complicated_conv_layer.3} parent=0 // pred_check
    _
  $region19: #{complicated_conv_layer.3} parent=0 // pred_check_branch
    %1063 = sbr.rel (0) target = $region21
  $region20: #{complicated_conv_layer.3} parent=0 // pred_region
    _
  $region21: #{complicated_conv_layer.3} parent=0 // pred_fallthru
    _
  // Predicated region
  $region22: #{complicated_conv_layer.3} parent=0 // pred_check
    _
  $region23: #{complicated_conv_layer.3} parent=0 // pred_check_branch
    %1065 = sbr.rel (0) target = $region25
  $region24: #{complicated_conv_layer.3} parent=0 // pred_region
    _
  $region25: #{complicated_conv_layer.3} parent=0 // pred_fallthru
    _

</llo_original>
